<compile_context>
chip_gen: v7x
topology: tpu7x:2x2x1
jax: 0.10.0
libtpu: 0.0.40
codegen_flags: <defaults>
</compile_context>

<pallas_src>
import functools

import jax
import jax.numpy as jnp
from jax.experimental import pallas as pl
from jax.experimental.pallas import tpu as pltpu


# ---------------------------------------------------------------------------
# Fused kernel: whole Feature2VertexLayer forward for one batch tile.
# Ref order: x, coeff, (w_fc0, w_n0, bias0, w_fc1, ...), out
#   per layer: y = x @ W_fc + coeff @ (x @ W_n) + (b_fc + b_n)
#   ReLU on hidden layers, none on the last layer.
# ---------------------------------------------------------------------------
def f2v_fused_kernel(*refs, num_layers):
    x_ref, coeff_ref = refs[0], refs[1]
    o_ref = refs[-1]
    wb_refs = refs[2:-1]

    bb, n_verts, _ = x_ref.shape

    # Batch-shared coefficient matrix, broadcast once (hoisted out of the
    # layer loop; JAX does not CSE broadcast_in_dim).
    coeff_b = jnp.broadcast_to(coeff_ref[...], (bb, n_verts, n_verts))  # bf16

    x = x_ref[...]  # (bb, N, F0) bf16 (cast host-side); activations carried f32

    for li in range(num_layers):
        w_fc = wb_refs[3 * li][...]        # (Fin, Fout) bf16
        w_n = wb_refs[3 * li + 1][...]     # (Fin, Fout) bf16
        bias = wb_refs[3 * li + 2][...]    # (1, Fout)  f32  (= b_fc + b_n)
        fin, fout = w_fc.shape

        # Feed the MXU bb*N rows; bf16 inputs, f32 accumulation.
        x2d = x.astype(jnp.bfloat16).reshape(bb * n_verts, fin)
        h_fc = jnp.dot(x2d, w_fc, preferred_element_type=jnp.float32)  # (bb*N, Fout)
        h_n = jnp.dot(x2d, w_n, preferred_element_type=jnp.float32)    # (bb*N, Fout)

        # Neighbour aggregation AFTER the Linear (associativity): the matmul
        # runs on Fout (< Fin) columns instead of Fin.
        h_n3 = h_n.astype(jnp.bfloat16).reshape(bb, n_verts, fout)
        agg = jnp.einsum("bij,bjf->bif", coeff_b, h_n3,
                         preferred_element_type=jnp.float32)           # (bb, N, Fout)

        y = (h_fc + bias).reshape(bb, n_verts, fout) + agg
        if li != num_layers - 1:
            y = jnp.maximum(y, 0.0)        # ReLU on hidden layers only
        x = y

    # Lane-dense store: flatten (N, Fout_last) into the lane dim.
    fl = x.shape[-1]
    o_ref[...] = x.reshape(bb, 1, n_verts * fl).astype(o_ref.dtype)


def _choose_batch_tile(B, N):
    """Batch rows per grid step.

    >= 2 grid steps whenever B >= 2 so (a) BlockSpec double-buffering can
    overlap DMA with compute and (b) the "parallel" batch axis gives both v7x
    TensorCores work without any device-kind sniffing.  Within that, keep
    bb*N large enough to amortize the ~0.35 us/step overhead.
    """
    if B <= 1:
        return max(B, 1)
    target_rows = 512
    bb = min(B // 2, max(1, -(-target_rows // N)))
    bb = max(1, bb)
    while B % bb:
        bb -= 1
    return bb


def feature2vertex_forward(features, A, Dinv, params):
    """Fused Feature2VertexLayer forward via a single pallas_call."""
    B, N, F0 = features.shape
    num_layers = len(params)
    Fl = params[-1][0].shape[1]

    # The module's adjacency_matrix helper replicates ONE graph across the
    # batch, so coeff = Dinv @ A is batch-shared: compute it once in XLA and
    # pass a single [N, N] bf16 block (removes A/Dinv from the kernel).
    coeff = jnp.einsum("ij,jk->ik", Dinv[0], A[0]).astype(jnp.bfloat16)

    # bf16 MXU inputs; f32 accumulation happens inside the kernel.
    x_bf16 = features.astype(jnp.bfloat16)
    wb = []
    for (w_fc, b_fc, w_n, b_n) in params:
        wb += [w_fc.astype(jnp.bfloat16),
               w_n.astype(jnp.bfloat16),
               (b_fc + b_n).astype(jnp.float32)]

    bb = _choose_batch_tile(B, N)
    grid = (B // bb,)

    in_specs = [
        pl.BlockSpec((bb, N, F0), lambda b: (b, 0, 0)),   # x  (batch-tiled)
        pl.BlockSpec((N, N), lambda b: (0, 0)),           # coeff (batch-shared)
    ]
    args = [x_bf16, coeff]
    for arr in wb:                                        # all 2D, full blocks
        in_specs.append(pl.BlockSpec(arr.shape, lambda b: (0, 0)))
        args.append(arr)

    out_specs = pl.BlockSpec((bb, 1, N * Fl), lambda b: (b, 0, 0))
    out_shape = jax.ShapeDtypeStruct((B, 1, N * Fl), features.dtype)

    # Explicit VMEM budget (blocks are double-buffered); headroom + clamp so
    # the limit is valid on v7x's 64 MiB as well as v5e/v6e's 128 MiB.
    def _bytes(a):
        return a.size * a.dtype.itemsize

    per_step = (2 * (bb * N * F0 * 2)            # x block, bf16, double-buffered
                + 2 * (bb * N * Fl * 4)          # out block, f32, double-buffered
                + 2 * _bytes(coeff)
                + 2 * sum(_bytes(a) for a in wb)
                + 4 * bb * N * max(F0, 64) * 4)  # activation scratch headroom
    vmem_limit = int(min(max(2 * per_step, 8 * 1024 * 1024), 48 * 1024 * 1024))

    kernel = functools.partial(f2v_fused_kernel, num_layers=num_layers)
    out = pl.pallas_call(
        kernel,
        out_shape=out_shape,
        grid_spec=pltpu.PrefetchScalarGridSpec(
            num_scalar_prefetch=0,
            grid=grid,
            in_specs=in_specs,
            out_specs=out_specs,
        ),
        compiler_params=pltpu.CompilerParams(
            dimension_semantics=("parallel",),
            vmem_limit_bytes=vmem_limit),
    )(*args)
    return out.reshape(B, N, Fl)


# ---------------------------------------------------------------------------
# Parameter construction (deterministic, PyTorch nn.Linear-style init).
# Weights stored already transposed as (in_features, out_features).
# ---------------------------------------------------------------------------
def init_linear(key, fin, fout):
    kw, kb = jax.random.split(key)
    bound = 1.0 / jnp.sqrt(jnp.float32(fin))
    w = jax.random.uniform(kw, (fin, fout), jnp.float32, -bound, bound)
    b = jax.random.uniform(kb, (1, fout), jnp.float32, -bound, bound)
    return w, b


def init_feature2vertex(key, in_features, hidden_layer_count):
    """Mirror Feature2VertexLayer.__init__ layer sizes."""
    dims = []
    for i in range(hidden_layer_count, 1, -1):
        dims.append((i * in_features // hidden_layer_count,
                     (i - 1) * in_features // hidden_layer_count))
    dims.append((in_features // hidden_layer_count, 4))   # gconv_last
    params = []
    for (fin, fout) in dims:
        key, k1, k2 = jax.random.split(key, 3)
        w_fc, b_fc = init_linear(k1, fin, fout)
        w_n, b_n = init_linear(k2, fin, fout)
        params.append((w_fc, b_fc, w_n, b_n))
    return params


# ---------------------------------------------------------------------------
# Adjacency / degree matrices from an edge list (same semantics as the
# PyTorch `adjacency_matrix` helper: one graph, replicated across the batch).
# ---------------------------------------------------------------------------
def build_adjacency(B, N, edges):
    A = jnp.zeros((N, N), jnp.float32)
    A = A.at[edges[:, 0], edges[:, 1]].set(1.0)
    A = A.at[edges[:, 1], edges[:, 0]].set(1.0)
    deg = jnp.sum(A, axis=0)                 # symmetric -> same as dim=1 sum
    Dinv = jnp.diag(1.0 / deg)
    A = jnp.broadcast_to(A[None], (B, N, N))
    Dinv = jnp.broadcast_to(Dinv[None], (B, N, N))
    return A, Dinv


# Pure-JAX f32 reference of the module's forward pass, for correctness checking.
def reference_forward(features, A, Dinv, params):
    n_layers = len(params)
    x = features
    coeff = jnp.einsum("bij,bjk->bik", Dinv, A)
    for li, (w_fc, b_fc, w_n, b_n) in enumerate(params):
        y = jnp.einsum("bnf,fo->bno", x, w_fc) + b_fc[0]
        yn = jnp.einsum("bij,bjf->bif", coeff, x)
        yn = jnp.einsum("bnf,fo->bno", yn, w_n) + b_n[0]
        x = y + yn
        if li != n_layers - 1:
            x = jnp.maximum(x, 0.0)
    return x


if __name__ == "__main__":
    B = 2              # batch
    N = 8              # number of vertices
    IN_FEATURES = 32
    HIDDEN_LAYER_COUNT = 4   # layers: 32->24->16->8, then last 8->4

    key = jax.random.PRNGKey(0)
    k_feat, k_params = jax.random.split(key)

    features = jax.random.normal(k_feat, (B, N, IN_FEATURES), jnp.float32)

    # Ring graph edges (every vertex has degree 2, so Dinv is finite).
    edges = jnp.stack(
        [jnp.arange(N, dtype=jnp.int32),
         (jnp.arange(N, dtype=jnp.int32) + 1) % N], axis=1)
    A, Dinv = build_adjacency(B, N, edges)

    params = init_feature2vertex(k_params, IN_FEATURES, HIDDEN_LAYER_COUNT)

    out = feature2vertex_forward(features, A, Dinv, params)
    out = jax.block_until_ready(out)

    ref = reference_forward(features, A, Dinv, params)
    assert out.shape == (B, N, 4), out.shape
    # bf16 matmul inputs with f32 accumulation -> loosened tolerance vs f32 ref.
    assert jnp.allclose(out, ref, atol=5e-2, rtol=5e-2), "mismatch vs reference"

    print("KERNEL_OK")
</pallas_src>

<mosaic_0001>
module attributes {stable_mosaic.version = 11 : i64} {
  func.func @f2v_fused_kernel(%arg0: i32, %arg1: memref<1x8x32xbf16, #tpu.memory_space<vmem>>, %arg2: memref<8x8xbf16, #tpu.memory_space<vmem>>, %arg3: memref<32x24xbf16, #tpu.memory_space<vmem>>, %arg4: memref<32x24xbf16, #tpu.memory_space<vmem>>, %arg5: memref<1x24xf32, #tpu.memory_space<vmem>>, %arg6: memref<24x16xbf16, #tpu.memory_space<vmem>>, %arg7: memref<24x16xbf16, #tpu.memory_space<vmem>>, %arg8: memref<1x16xf32, #tpu.memory_space<vmem>>, %arg9: memref<16x8xbf16, #tpu.memory_space<vmem>>, %arg10: memref<16x8xbf16, #tpu.memory_space<vmem>>, %arg11: memref<1x8xf32, #tpu.memory_space<vmem>>, %arg12: memref<8x4xbf16, #tpu.memory_space<vmem>>, %arg13: memref<8x4xbf16, #tpu.memory_space<vmem>>, %arg14: memref<1x4xf32, #tpu.memory_space<vmem>>, %arg15: memref<1x1x32xf32, #tpu.memory_space<vmem>>) attributes {dimension_semantics = [#tpu.dimension_semantics<parallel>], iteration_bounds = array<i64: 2>, scalar_prefetch = 0 : i64, scratch_operands = 0 : i64, tpu.core_type = #tpu.core_type<tc>, window_params = [{transform_indices = @transform_0, window_bounds = array<i64: 1, 8, 32>}, {pipeline_mode = #tpu.pipeline_mode<synchronous>, transform_indices = @transform_1, window_bounds = array<i64: 8, 8>}, {pipeline_mode = #tpu.pipeline_mode<synchronous>, transform_indices = @transform_2, window_bounds = array<i64: 32, 24>}, {pipeline_mode = #tpu.pipeline_mode<synchronous>, transform_indices = @transform_3, window_bounds = array<i64: 32, 24>}, {pipeline_mode = #tpu.pipeline_mode<synchronous>, transform_indices = @transform_4, window_bounds = array<i64: 1, 24>}, {pipeline_mode = #tpu.pipeline_mode<synchronous>, transform_indices = @transform_5, window_bounds = array<i64: 24, 16>}, {pipeline_mode = #tpu.pipeline_mode<synchronous>, transform_indices = @transform_6, window_bounds = array<i64: 24, 16>}, {pipeline_mode = #tpu.pipeline_mode<synchronous>, transform_indices = @transform_7, window_bounds = array<i64: 1, 16>}, {pipeline_mode = #tpu.pipeline_mode<synchronous>, transform_indices = @transform_8, window_bounds = array<i64: 16, 8>}, {pipeline_mode = #tpu.pipeline_mode<synchronous>, transform_indices = @transform_9, window_bounds = array<i64: 16, 8>}, {pipeline_mode = #tpu.pipeline_mode<synchronous>, transform_indices = @transform_10, window_bounds = array<i64: 1, 8>}, {pipeline_mode = #tpu.pipeline_mode<synchronous>, transform_indices = @transform_11, window_bounds = array<i64: 8, 4>}, {pipeline_mode = #tpu.pipeline_mode<synchronous>, transform_indices = @transform_12, window_bounds = array<i64: 8, 4>}, {pipeline_mode = #tpu.pipeline_mode<synchronous>, transform_indices = @transform_13, window_bounds = array<i64: 1, 4>}, {transform_indices = @transform_14, window_bounds = array<i64: 1, 1, 32>}]} {
    %c0 = arith.constant 0 : index
    %c0_0 = arith.constant 0 : index
    %0 = vector.load %arg2[%c0, %c0_0] : memref<8x8xbf16, #tpu.memory_space<vmem>>, vector<8x8xbf16>
    %1 = vector.shape_cast %0 : vector<8x8xbf16> to vector<1x8x8xbf16>
    %c0_1 = arith.constant 0 : index
    %c0_2 = arith.constant 0 : index
    %c0_3 = arith.constant 0 : index
    %2 = vector.load %arg1[%c0_1, %c0_2, %c0_3] : memref<1x8x32xbf16, #tpu.memory_space<vmem>>, vector<1x8x32xbf16>
    %c0_4 = arith.constant 0 : index
    %c0_5 = arith.constant 0 : index
    %3 = vector.load %arg3[%c0_4, %c0_5] : memref<32x24xbf16, #tpu.memory_space<vmem>>, vector<32x24xbf16>
    %c0_6 = arith.constant 0 : index
    %c0_7 = arith.constant 0 : index
    %4 = vector.load %arg4[%c0_6, %c0_7] : memref<32x24xbf16, #tpu.memory_space<vmem>>, vector<32x24xbf16>
    %c0_8 = arith.constant 0 : index
    %c0_9 = arith.constant 0 : index
    %5 = vector.load %arg5[%c0_8, %c0_9] : memref<1x24xf32, #tpu.memory_space<vmem>>, vector<1x24xf32>
    %6 = vector.shape_cast %2 : vector<1x8x32xbf16> to vector<8x32xbf16>
    %cst = arith.constant dense<0.000000e+00> : vector<8x24xf32>
    %7 = tpu.matmul %6, %3, %cst {dimension_numbers = #tpu.dot_dimension_numbers<[1], [0], [0], [1], [0, 0, 1, 1], [], []>} : vector<8x32xbf16>, vector<32x24xbf16>, vector<8x24xf32> -> vector<8x24xf32>
    %cst_10 = arith.constant dense<0.000000e+00> : vector<8x24xf32>
    %8 = tpu.matmul %6, %4, %cst_10 {dimension_numbers = #tpu.dot_dimension_numbers<[1], [0], [0], [1], [0, 0, 1, 1], [], []>} : vector<8x32xbf16>, vector<32x24xbf16>, vector<8x24xf32> -> vector<8x24xf32>
    %9 = arith.truncf %8 : vector<8x24xf32> to vector<8x24xbf16>
    %10 = vector.shape_cast %9 : vector<8x24xbf16> to vector<1x8x24xbf16>
    "tpu.trace_start"() <{level = 10 : i32, message = "bij,bjf->bif"}> : () -> ()
    %cst_11 = arith.constant dense<0.000000e+00> : vector<1x8x24xf32>
    %11 = tpu.matmul %1, %10, %cst_11 {dimension_numbers = #tpu.dot_dimension_numbers<[2], [1], [1], [2], [0, 0, 0, 1, 1, 2], [0], [0]>} : vector<1x8x8xbf16>, vector<1x8x24xbf16>, vector<1x8x24xf32> -> vector<1x8x24xf32>
    "tpu.trace_stop"() : () -> ()
    %12 = vector.broadcast %5 : vector<1x24xf32> to vector<8x24xf32>
    %13 = arith.addf %7, %12 : vector<8x24xf32>
    %14 = vector.shape_cast %13 : vector<8x24xf32> to vector<1x8x24xf32>
    %15 = arith.addf %14, %11 : vector<1x8x24xf32>
    %cst_12 = arith.constant 0.000000e+00 : f32
    %16 = vector.broadcast %cst_12 : f32 to vector<1x8x24xf32>
    %17 = arith.maximumf %15, %16 : vector<1x8x24xf32>
    %c0_13 = arith.constant 0 : index
    %c0_14 = arith.constant 0 : index
    %18 = vector.load %arg6[%c0_13, %c0_14] : memref<24x16xbf16, #tpu.memory_space<vmem>>, vector<24x16xbf16>
    %c0_15 = arith.constant 0 : index
    %c0_16 = arith.constant 0 : index
    %19 = vector.load %arg7[%c0_15, %c0_16] : memref<24x16xbf16, #tpu.memory_space<vmem>>, vector<24x16xbf16>
    %c0_17 = arith.constant 0 : index
    %c0_18 = arith.constant 0 : index
    %20 = vector.load %arg8[%c0_17, %c0_18] : memref<1x16xf32, #tpu.memory_space<vmem>>, vector<1x16xf32>
    %21 = arith.truncf %17 : vector<1x8x24xf32> to vector<1x8x24xbf16>
    %22 = vector.shape_cast %21 : vector<1x8x24xbf16> to vector<8x24xbf16>
    %cst_19 = arith.constant dense<0.000000e+00> : vector<8x16xf32>
    %23 = tpu.matmul %22, %18, %cst_19 {dimension_numbers = #tpu.dot_dimension_numbers<[1], [0], [0], [1], [0, 0, 1, 1], [], []>} : vector<8x24xbf16>, vector<24x16xbf16>, vector<8x16xf32> -> vector<8x16xf32>
    %cst_20 = arith.constant dense<0.000000e+00> : vector<8x16xf32>
    %24 = tpu.matmul %22, %19, %cst_20 {dimension_numbers = #tpu.dot_dimension_numbers<[1], [0], [0], [1], [0, 0, 1, 1], [], []>} : vector<8x24xbf16>, vector<24x16xbf16>, vector<8x16xf32> -> vector<8x16xf32>
    %25 = arith.truncf %24 : vector<8x16xf32> to vector<8x16xbf16>
    %26 = vector.shape_cast %25 : vector<8x16xbf16> to vector<1x8x16xbf16>
    "tpu.trace_start"() <{level = 10 : i32, message = "bij,bjf->bif"}> : () -> ()
    %cst_21 = arith.constant dense<0.000000e+00> : vector<1x8x16xf32>
    %27 = tpu.matmul %1, %26, %cst_21 {dimension_numbers = #tpu.dot_dimension_numbers<[2], [1], [1], [2], [0, 0, 0, 1, 1, 2], [0], [0]>} : vector<1x8x8xbf16>, vector<1x8x16xbf16>, vector<1x8x16xf32> -> vector<1x8x16xf32>
    "tpu.trace_stop"() : () -> ()
    %28 = vector.broadcast %20 : vector<1x16xf32> to vector<8x16xf32>
    %29 = arith.addf %23, %28 : vector<8x16xf32>
    %30 = vector.shape_cast %29 : vector<8x16xf32> to vector<1x8x16xf32>
    %31 = arith.addf %30, %27 : vector<1x8x16xf32>
    %cst_22 = arith.constant 0.000000e+00 : f32
    %32 = vector.broadcast %cst_22 : f32 to vector<1x8x16xf32>
    %33 = arith.maximumf %31, %32 : vector<1x8x16xf32>
    %c0_23 = arith.constant 0 : index
    %c0_24 = arith.constant 0 : index
    %34 = vector.load %arg9[%c0_23, %c0_24] : memref<16x8xbf16, #tpu.memory_space<vmem>>, vector<16x8xbf16>
    %c0_25 = arith.constant 0 : index
    %c0_26 = arith.constant 0 : index
    %35 = vector.load %arg10[%c0_25, %c0_26] : memref<16x8xbf16, #tpu.memory_space<vmem>>, vector<16x8xbf16>
    %c0_27 = arith.constant 0 : index
    %c0_28 = arith.constant 0 : index
    %36 = vector.load %arg11[%c0_27, %c0_28] : memref<1x8xf32, #tpu.memory_space<vmem>>, vector<1x8xf32>
    %37 = arith.truncf %33 : vector<1x8x16xf32> to vector<1x8x16xbf16>
    %38 = vector.shape_cast %37 : vector<1x8x16xbf16> to vector<8x16xbf16>
    %cst_29 = arith.constant dense<0.000000e+00> : vector<8x8xf32>
    %39 = tpu.matmul %38, %34, %cst_29 {dimension_numbers = #tpu.dot_dimension_numbers<[1], [0], [0], [1], [0, 0, 1, 1], [], []>} : vector<8x16xbf16>, vector<16x8xbf16>, vector<8x8xf32> -> vector<8x8xf32>
    %cst_30 = arith.constant dense<0.000000e+00> : vector<8x8xf32>
    %40 = tpu.matmul %38, %35, %cst_30 {dimension_numbers = #tpu.dot_dimension_numbers<[1], [0], [0], [1], [0, 0, 1, 1], [], []>} : vector<8x16xbf16>, vector<16x8xbf16>, vector<8x8xf32> -> vector<8x8xf32>
    %41 = arith.truncf %40 : vector<8x8xf32> to vector<8x8xbf16>
    %42 = vector.shape_cast %41 : vector<8x8xbf16> to vector<1x8x8xbf16>
    "tpu.trace_start"() <{level = 10 : i32, message = "bij,bjf->bif"}> : () -> ()
    %cst_31 = arith.constant dense<0.000000e+00> : vector<1x8x8xf32>
    %43 = tpu.matmul %1, %42, %cst_31 {dimension_numbers = #tpu.dot_dimension_numbers<[2], [1], [1], [2], [0, 0, 0, 1, 1, 2], [0], [0]>} : vector<1x8x8xbf16>, vector<1x8x8xbf16>, vector<1x8x8xf32> -> vector<1x8x8xf32>
    "tpu.trace_stop"() : () -> ()
    %44 = vector.broadcast %36 : vector<1x8xf32> to vector<8x8xf32>
    %45 = arith.addf %39, %44 : vector<8x8xf32>
    %46 = vector.shape_cast %45 : vector<8x8xf32> to vector<1x8x8xf32>
    %47 = arith.addf %46, %43 : vector<1x8x8xf32>
    %cst_32 = arith.constant 0.000000e+00 : f32
    %48 = vector.broadcast %cst_32 : f32 to vector<1x8x8xf32>
    %49 = arith.maximumf %47, %48 : vector<1x8x8xf32>
    %c0_33 = arith.constant 0 : index
    %c0_34 = arith.constant 0 : index
    %50 = vector.load %arg12[%c0_33, %c0_34] : memref<8x4xbf16, #tpu.memory_space<vmem>>, vector<8x4xbf16>
    %c0_35 = arith.constant 0 : index
    %c0_36 = arith.constant 0 : index
    %51 = vector.load %arg13[%c0_35, %c0_36] : memref<8x4xbf16, #tpu.memory_space<vmem>>, vector<8x4xbf16>
    %c0_37 = arith.constant 0 : index
    %c0_38 = arith.constant 0 : index
    %52 = vector.load %arg14[%c0_37, %c0_38] : memref<1x4xf32, #tpu.memory_space<vmem>>, vector<1x4xf32>
    %53 = arith.truncf %49 : vector<1x8x8xf32> to vector<1x8x8xbf16>
    %54 = vector.shape_cast %53 : vector<1x8x8xbf16> to vector<8x8xbf16>
    %cst_39 = arith.constant dense<0.000000e+00> : vector<8x4xf32>
    %55 = tpu.matmul %54, %50, %cst_39 {dimension_numbers = #tpu.dot_dimension_numbers<[1], [0], [0], [1], [0, 0, 1, 1], [], []>} : vector<8x8xbf16>, vector<8x4xbf16>, vector<8x4xf32> -> vector<8x4xf32>
    %cst_40 = arith.constant dense<0.000000e+00> : vector<8x4xf32>
    %56 = tpu.matmul %54, %51, %cst_40 {dimension_numbers = #tpu.dot_dimension_numbers<[1], [0], [0], [1], [0, 0, 1, 1], [], []>} : vector<8x8xbf16>, vector<8x4xbf16>, vector<8x4xf32> -> vector<8x4xf32>
    %57 = arith.truncf %56 : vector<8x4xf32> to vector<8x4xbf16>
    %58 = vector.shape_cast %57 : vector<8x4xbf16> to vector<1x8x4xbf16>
    "tpu.trace_start"() <{level = 10 : i32, message = "bij,bjf->bif"}> : () -> ()
    %cst_41 = arith.constant dense<0.000000e+00> : vector<1x8x4xf32>
    %59 = tpu.matmul %1, %58, %cst_41 {dimension_numbers = #tpu.dot_dimension_numbers<[2], [1], [1], [2], [0, 0, 0, 1, 1, 2], [0], [0]>} : vector<1x8x8xbf16>, vector<1x8x4xbf16>, vector<1x8x4xf32> -> vector<1x8x4xf32>
    "tpu.trace_stop"() : () -> ()
    %60 = vector.broadcast %52 : vector<1x4xf32> to vector<8x4xf32>
    %61 = arith.addf %55, %60 : vector<8x4xf32>
    %62 = vector.shape_cast %61 : vector<8x4xf32> to vector<1x8x4xf32>
    %63 = arith.addf %62, %59 : vector<1x8x4xf32>
    %64 = vector.shape_cast %63 : vector<1x8x4xf32> to vector<1x1x32xf32>
    %c0_42 = arith.constant 0 : index
    %c0_43 = arith.constant 0 : index
    %c0_44 = arith.constant 0 : index
    %65 = vector.load %arg15[%c0_42, %c0_43, %c0_44] : memref<1x1x32xf32, #tpu.memory_space<vmem>>, vector<1x1x32xf32>
    tpu.vector_store %arg15[%c0_42, %c0_43, %c0_44], %64 {strides = array<i32>} : memref<1x1x32xf32, #tpu.memory_space<vmem>>, vector<1x1x32xf32>,
    return
  }
  func.func @transform_0(%arg0: i32) -> (i32, i32, i32) {
    %c0_i32 = arith.constant 0 : i32
    %c0_i32_0 = arith.constant 0 : i32
    %c0_i32_1 = arith.constant 0 : i32
    return %arg0, %c0_i32, %c0_i32_0 : i32, i32, i32
  }
  func.func @transform_1(%arg0: i32) -> (i32, i32) {
    %c0_i32 = arith.constant 0 : i32
    %c0_i32_0 = arith.constant 0 : i32
    %c0_i32_1 = arith.constant 0 : i32
    return %c0_i32, %c0_i32_0 : i32, i32
  }
  func.func @transform_2(%arg0: i32) -> (i32, i32) {
    %c0_i32 = arith.constant 0 : i32
    %c0_i32_0 = arith.constant 0 : i32
    %c0_i32_1 = arith.constant 0 : i32
    return %c0_i32, %c0_i32_0 : i32, i32
  }
  func.func @transform_3(%arg0: i32) -> (i32, i32) {
    %c0_i32 = arith.constant 0 : i32
    %c0_i32_0 = arith.constant 0 : i32
    %c0_i32_1 = arith.constant 0 : i32
    return %c0_i32, %c0_i32_0 : i32, i32
  }
  func.func @transform_4(%arg0: i32) -> (i32, i32) {
    %c0_i32 = arith.constant 0 : i32
    %c0_i32_0 = arith.constant 0 : i32
    %c0_i32_1 = arith.constant 0 : i32
    return %c0_i32, %c0_i32_0 : i32, i32
  }
  func.func @transform_5(%arg0: i32) -> (i32, i32) {
    %c0_i32 = arith.constant 0 : i32
    %c0_i32_0 = arith.constant 0 : i32
    %c0_i32_1 = arith.constant 0 : i32
    return %c0_i32, %c0_i32_0 : i32, i32
  }
  func.func @transform_6(%arg0: i32) -> (i32, i32) {
    %c0_i32 = arith.constant 0 : i32
    %c0_i32_0 = arith.constant 0 : i32
    %c0_i32_1 = arith.constant 0 : i32
    return %c0_i32, %c0_i32_0 : i32, i32
  }
  func.func @transform_7(%arg0: i32) -> (i32, i32) {
    %c0_i32 = arith.constant 0 : i32
    %c0_i32_0 = arith.constant 0 : i32
    %c0_i32_1 = arith.constant 0 : i32
    return %c0_i32, %c0_i32_0 : i32, i32
  }
  func.func @transform_8(%arg0: i32) -> (i32, i32) {
    %c0_i32 = arith.constant 0 : i32
    %c0_i32_0 = arith.constant 0 : i32
    %c0_i32_1 = arith.constant 0 : i32
    return %c0_i32, %c0_i32_0 : i32, i32
  }
  func.func @transform_9(%arg0: i32) -> (i32, i32) {
    %c0_i32 = arith.constant 0 : i32
    %c0_i32_0 = arith.constant 0 : i32
    %c0_i32_1 = arith.constant 0 : i32
    return %c0_i32, %c0_i32_0 : i32, i32
  }
  func.func @transform_10(%arg0: i32) -> (i32, i32) {
    %c0_i32 = arith.constant 0 : i32
    %c0_i32_0 = arith.constant 0 : i32
    %c0_i32_1 = arith.constant 0 : i32
    return %c0_i32, %c0_i32_0 : i32, i32
  }
  func.func @transform_11(%arg0: i32) -> (i32, i32) {
    %c0_i32 = arith.constant 0 : i32
    %c0_i32_0 = arith.constant 0 : i32
    %c0_i32_1 = arith.constant 0 : i32
    return %c0_i32, %c0_i32_0 : i32, i32
  }
  func.func @transform_12(%arg0: i32) -> (i32, i32) {
    %c0_i32 = arith.constant 0 : i32
    %c0_i32_0 = arith.constant 0 : i32
    %c0_i32_1 = arith.constant 0 : i32
    return %c0_i32, %c0_i32_0 : i32, i32
  }
  func.func @transform_13(%arg0: i32) -> (i32, i32) {
    %c0_i32 = arith.constant 0 : i32
    %c0_i32_0 = arith.constant 0 : i32
    %c0_i32_1 = arith.constant 0 : i32
    return %c0_i32, %c0_i32_0 : i32, i32
  }
  func.func @transform_14(%arg0: i32) -> (i32, i32, i32) {
    %c0_i32 = arith.constant 0 : i32
    %c0_i32_0 = arith.constant 0 : i32
    %c0_i32_1 = arith.constant 0 : i32
    return %arg0, %c0_i32, %c0_i32_0 : i32, i32, i32
  }
}

</mosaic_0001>

<llo_original>
// kernel: tpu_custom_call.1
$region0: #{tpu_custom_call.1}
  #allocation0 [shape = 'u32[]', space=smem, size = 0x4, offset = 0x4, fixed_abs, tag = 'smem constant byte address 0x4 - core index']
  #allocation1 [shape = 'u32[144,128]{1,0:T(1,128)}', space=vmem, size = 0x12000, scoped, tag = 'internal scratch']
  %s0 = inlined_call_operand.vmem [shape: bf16[2,8,32], index: 0, kind: input, shape index: {}]
  %s1 = inlined_call_operand.vmem [shape: bf16[8,8], index: 1, kind: input, shape index: {}]
  %s2 = inlined_call_operand.vmem [shape: bf16[32,24], index: 2, kind: input, shape index: {}]
  %s3 = inlined_call_operand.vmem [shape: bf16[32,24], index: 3, kind: input, shape index: {}]
  %s4 = inlined_call_operand.vmem [shape: f32[1,24], index: 4, kind: input, shape index: {}]
  %s5 = inlined_call_operand.vmem [shape: bf16[24,16], index: 5, kind: input, shape index: {}]
  %s6 = inlined_call_operand.vmem [shape: bf16[24,16], index: 6, kind: input, shape index: {}]
  %s7 = inlined_call_operand.vmem [shape: f32[1,16], index: 7, kind: input, shape index: {}]
  %s8 = inlined_call_operand.vmem [shape: bf16[16,8], index: 8, kind: input, shape index: {}]
  %s9 = inlined_call_operand.vmem [shape: bf16[16,8], index: 9, kind: input, shape index: {}]
  %s10 = inlined_call_operand.vmem [shape: f32[1,8], index: 10, kind: input, shape index: {}]
  %s11 = inlined_call_operand.vmem [shape: bf16[8,4], index: 11, kind: input, shape index: {}]
  %s12 = inlined_call_operand.vmem [shape: bf16[8,4], index: 12, kind: input, shape index: {}]
  %s13 = inlined_call_operand.vmem [shape: f32[1,4], index: 13, kind: input, shape index: {}]
  %s14 = inlined_call_operand.hbm [shape: f32[2,1,32], index: 14, kind: output, shape index: {}]
  %s15 = sld [smem:[#allocation0]]
  $region89: #{tpu_custom_call.1} parent=0
    _
  %s17 = ssub.s32 1, %s15
  %s18 = scalar_select 0, %s17, %s15
  $region1: #{tpu_custom_call.1} parent=0
    #allocation2 [shape = 'u8[1024]{0}', space=vmem, size = 0x400, scoped, tag = 'output window, operand 0']
    #allocation3 [shape = 's32[2]{0}', space=sflag, size = 0x8, scoped, tag = 'scoped memory for tpu_custom_call.1']
    %19 = vsyncpa [#allocation3], 0
    %s20 = scalar_lea.sflag [#allocation3], 1
    %21 = vsyncpa %s20, 0
    loop: start=0, step=1, limit=4
    $region2: #{tpu_custom_call.1} parent=1 // loop_pre_header
      _
    $region3: #{tpu_custom_call.1} parent=1 // loop_header
      %s23 = sphi 0, %s27
      %p24 = scmp.ge.s32.totalorder %s23, 4
      %s33 = sphi 0, %s35
      %s36 = sphi 0, %s33
      %s37 = sphi 0, %s36
      %s53 = sphi 0, %s37
      %s57 = sphi 0, %s57
      %s59 = sphi 0, %s57
      %s60 = sphi 0, %s59
      %s74 = sphi 0, %s60
      %s78 = sphi 0, %s78
      %s80 = sphi 0, %s78
      %s81 = sphi 0, %s80
      %s95 = sphi 0, %s81
      %s99 = sphi 0, %s99
      %s101 = sphi 0, %s99
      %s102 = sphi 0, %s101
      %s116 = sphi 0, %s102
      %s120 = sphi 0, %s120
      %s122 = sphi 0, %s120
      %s123 = sphi 0, %s122
      %s137 = sphi 0, %s123
      %s141 = sphi 0, %s141
      %s143 = sphi 0, %s141
      %s144 = sphi 0, %s143
      %s158 = sphi 0, %s144
      %s162 = sphi 0, %s162
      %s164 = sphi 0, %s162
      %s165 = sphi 0, %s164
      %s179 = sphi 0, %s165
      %s183 = sphi 0, %s183
      %s185 = sphi 0, %s183
      %s186 = sphi 0, %s185
      %s200 = sphi 0, %s186
      %s204 = sphi 0, %s204
      %s206 = sphi 0, %s204
      %s207 = sphi 0, %s206
      %s221 = sphi 0, %s207
      %s225 = sphi 0, %s225
      %s227 = sphi 0, %s225
      %s228 = sphi 0, %s227
      %s242 = sphi 0, %s228
      %s246 = sphi 0, %s246
      %s248 = sphi 0, %s246
      %s249 = sphi 0, %s248
      %s263 = sphi 0, %s249
      %s267 = sphi 0, %s267
      %s269 = sphi 0, %s267
      %s270 = sphi 0, %s269
      %s284 = sphi 0, %s270
      %s288 = sphi 0, %s288
      %s290 = sphi 0, %s288
      %s291 = sphi 0, %s290
      %s305 = sphi 0, %s291
      %s309 = sphi 0, %s309
      %s311 = sphi 0, %s309
      %s312 = sphi 0, %s311
      %s326 = sphi 0, %s312
      %s332 = sphi 0, %s334
      %s335 = sphi 0, %s332
      %s336 = sphi 0, %s335
      %s352 = sphi 0, %s336
    $region4: #{tpu_custom_call.1} parent=1 // loop_header_branch
      %26 = sbr.rel (%p24) target = $region8
    $region5: #{tpu_custom_call.1} parent=1 // loop_body
      %s28 = ssub.s32 %s23, 1
      %s29 = ssub.s32 %s23, 2
      %s30 = sadd.s32 %s23, 1
      %s31 = ssub.s32 %s23, %s30
      %p32 = scmp.eq.s32.totalorder %s31, 0
      %s34 = sadd.s32 %s33, 1
      %s35 = scalar_select %p32, %s33, %s34
      %p38 = pneg %p32
      %p39 = scmp.eq.s32.totalorder %s23, 1
      %p40 = por %p38, %p39
      %p41 = scmp.ne.s32.totalorder %s33, %s36
      %p42 = scmp.eq.s32.totalorder %s23, 0
      %p43 = por %p41, %p42
      %p44 = scmp.ne.s32.totalorder %s33, %s36
      %p45 = scmp.eq.s32.totalorder %s28, 1
      %p46 = por %p44, %p45
      %p47 = scmp.ne.s32.totalorder %s36, %s37
      %p48 = scmp.eq.s32.totalorder %s28, 0
      %p49 = por %p47, %p48
      %p50 = scmp.ne.s32.totalorder %s36, %s37
      %p51 = scmp.eq.s32.totalorder %s29, 1
      %p52 = por %p50, %p51
      %p54 = scmp.ne.s32.totalorder %s37, %s53
      %p55 = scmp.eq.s32.totalorder %s29, 0
      %p56 = por %p54, %p55
      %s58 = sadd.s32 %s57, 1
      %p61 = scmp.eq.s32.totalorder %s23, 1
      %p62 = scmp.ne.s32.totalorder %s57, %s59
      %p63 = scmp.eq.s32.totalorder %s23, 0
      %p64 = por %p62, %p63
      %p65 = scmp.ne.s32.totalorder %s57, %s59
      %p66 = scmp.eq.s32.totalorder %s28, 1
      %p67 = por %p65, %p66
      %p68 = scmp.ne.s32.totalorder %s59, %s60
      %p69 = scmp.eq.s32.totalorder %s28, 0
      %p70 = por %p68, %p69
      %p71 = scmp.ne.s32.totalorder %s59, %s60
      %p72 = scmp.eq.s32.totalorder %s29, 1
      %p73 = por %p71, %p72
      %p75 = scmp.ne.s32.totalorder %s60, %s74
      %p76 = scmp.eq.s32.totalorder %s29, 0
      %p77 = por %p75, %p76
      %s79 = sadd.s32 %s78, 1
      %p82 = scmp.eq.s32.totalorder %s23, 1
      %p83 = scmp.ne.s32.totalorder %s78, %s80
      %p84 = scmp.eq.s32.totalorder %s23, 0
      %p85 = por %p83, %p84
      %p86 = scmp.ne.s32.totalorder %s78, %s80
      %p87 = scmp.eq.s32.totalorder %s28, 1
      %p88 = por %p86, %p87
      %p89 = scmp.ne.s32.totalorder %s80, %s81
      %p90 = scmp.eq.s32.totalorder %s28, 0
      %p91 = por %p89, %p90
      %p92 = scmp.ne.s32.totalorder %s80, %s81
      %p93 = scmp.eq.s32.totalorder %s29, 1
      %p94 = por %p92, %p93
      %p96 = scmp.ne.s32.totalorder %s81, %s95
      %p97 = scmp.eq.s32.totalorder %s29, 0
      %p98 = por %p96, %p97
      %s100 = sadd.s32 %s99, 1
      %p103 = scmp.eq.s32.totalorder %s23, 1
      %p104 = scmp.ne.s32.totalorder %s99, %s101
      %p105 = scmp.eq.s32.totalorder %s23, 0
      %p106 = por %p104, %p105
      %p107 = scmp.ne.s32.totalorder %s99, %s101
      %p108 = scmp.eq.s32.totalorder %s28, 1
      %p109 = por %p107, %p108
      %p110 = scmp.ne.s32.totalorder %s101, %s102
      %p111 = scmp.eq.s32.totalorder %s28, 0
      %p112 = por %p110, %p111
      %p113 = scmp.ne.s32.totalorder %s101, %s102
      %p114 = scmp.eq.s32.totalorder %s29, 1
      %p115 = por %p113, %p114
      %p117 = scmp.ne.s32.totalorder %s102, %s116
      %p118 = scmp.eq.s32.totalorder %s29, 0
      %p119 = por %p117, %p118
      %s121 = sadd.s32 %s120, 1
      %p124 = scmp.eq.s32.totalorder %s23, 1
      %p125 = scmp.ne.s32.totalorder %s120, %s122
      %p126 = scmp.eq.s32.totalorder %s23, 0
      %p127 = por %p125, %p126
      %p128 = scmp.ne.s32.totalorder %s120, %s122
      %p129 = scmp.eq.s32.totalorder %s28, 1
      %p130 = por %p128, %p129
      %p131 = scmp.ne.s32.totalorder %s122, %s123
      %p132 = scmp.eq.s32.totalorder %s28, 0
      %p133 = por %p131, %p132
      %p134 = scmp.ne.s32.totalorder %s122, %s123
      %p135 = scmp.eq.s32.totalorder %s29, 1
      %p136 = por %p134, %p135
      %p138 = scmp.ne.s32.totalorder %s123, %s137
      %p139 = scmp.eq.s32.totalorder %s29, 0
      %p140 = por %p138, %p139
      %s142 = sadd.s32 %s141, 1
      %p145 = scmp.eq.s32.totalorder %s23, 1
      %p146 = scmp.ne.s32.totalorder %s141, %s143
      %p147 = scmp.eq.s32.totalorder %s23, 0
      %p148 = por %p146, %p147
      %p149 = scmp.ne.s32.totalorder %s141, %s143
      %p150 = scmp.eq.s32.totalorder %s28, 1
      %p151 = por %p149, %p150
      %p152 = scmp.ne.s32.totalorder %s143, %s144
      %p153 = scmp.eq.s32.totalorder %s28, 0
      %p154 = por %p152, %p153
      %p155 = scmp.ne.s32.totalorder %s143, %s144
      %p156 = scmp.eq.s32.totalorder %s29, 1
      %p157 = por %p155, %p156
      %p159 = scmp.ne.s32.totalorder %s144, %s158
      %p160 = scmp.eq.s32.totalorder %s29, 0
      %p161 = por %p159, %p160
      %s163 = sadd.s32 %s162, 1
      %p166 = scmp.eq.s32.totalorder %s23, 1
      %p167 = scmp.ne.s32.totalorder %s162, %s164
      %p168 = scmp.eq.s32.totalorder %s23, 0
      %p169 = por %p167, %p168
      %p170 = scmp.ne.s32.totalorder %s162, %s164
      %p171 = scmp.eq.s32.totalorder %s28, 1
      %p172 = por %p170, %p171
      %p173 = scmp.ne.s32.totalorder %s164, %s165
      %p174 = scmp.eq.s32.totalorder %s28, 0
      %p175 = por %p173, %p174
      %p176 = scmp.ne.s32.totalorder %s164, %s165
      %p177 = scmp.eq.s32.totalorder %s29, 1
      %p178 = por %p176, %p177
      %p180 = scmp.ne.s32.totalorder %s165, %s179
      %p181 = scmp.eq.s32.totalorder %s29, 0
      %p182 = por %p180, %p181
      %s184 = sadd.s32 %s183, 1
      %p187 = scmp.eq.s32.totalorder %s23, 1
      %p188 = scmp.ne.s32.totalorder %s183, %s185
      %p189 = scmp.eq.s32.totalorder %s23, 0
      %p190 = por %p188, %p189
      %p191 = scmp.ne.s32.totalorder %s183, %s185
      %p192 = scmp.eq.s32.totalorder %s28, 1
      %p193 = por %p191, %p192
      %p194 = scmp.ne.s32.totalorder %s185, %s186
      %p195 = scmp.eq.s32.totalorder %s28, 0
      %p196 = por %p194, %p195
      %p197 = scmp.ne.s32.totalorder %s185, %s186
      %p198 = scmp.eq.s32.totalorder %s29, 1
      %p199 = por %p197, %p198
      %p201 = scmp.ne.s32.totalorder %s186, %s200
      %p202 = scmp.eq.s32.totalorder %s29, 0
      %p203 = por %p201, %p202
      %s205 = sadd.s32 %s204, 1
      %p208 = scmp.eq.s32.totalorder %s23, 1
      %p209 = scmp.ne.s32.totalorder %s204, %s206
      %p210 = scmp.eq.s32.totalorder %s23, 0
      %p211 = por %p209, %p210
      %p212 = scmp.ne.s32.totalorder %s204, %s206
      %p213 = scmp.eq.s32.totalorder %s28, 1
      %p214 = por %p212, %p213
      %p215 = scmp.ne.s32.totalorder %s206, %s207
      %p216 = scmp.eq.s32.totalorder %s28, 0
      %p217 = por %p215, %p216
      %p218 = scmp.ne.s32.totalorder %s206, %s207
      %p219 = scmp.eq.s32.totalorder %s29, 1
      %p220 = por %p218, %p219
      %p222 = scmp.ne.s32.totalorder %s207, %s221
      %p223 = scmp.eq.s32.totalorder %s29, 0
      %p224 = por %p222, %p223
      %s226 = sadd.s32 %s225, 1
      %p229 = scmp.eq.s32.totalorder %s23, 1
      %p230 = scmp.ne.s32.totalorder %s225, %s227
      %p231 = scmp.eq.s32.totalorder %s23, 0
      %p232 = por %p230, %p231
      %p233 = scmp.ne.s32.totalorder %s225, %s227
      %p234 = scmp.eq.s32.totalorder %s28, 1
      %p235 = por %p233, %p234
      %p236 = scmp.ne.s32.totalorder %s227, %s228
      %p237 = scmp.eq.s32.totalorder %s28, 0
      %p238 = por %p236, %p237
      %p239 = scmp.ne.s32.totalorder %s227, %s228
      %p240 = scmp.eq.s32.totalorder %s29, 1
      %p241 = por %p239, %p240
      %p243 = scmp.ne.s32.totalorder %s228, %s242
      %p244 = scmp.eq.s32.totalorder %s29, 0
      %p245 = por %p243, %p244
      %s247 = sadd.s32 %s246, 1
      %p250 = scmp.eq.s32.totalorder %s23, 1
      %p251 = scmp.ne.s32.totalorder %s246, %s248
      %p252 = scmp.eq.s32.totalorder %s23, 0
      %p253 = por %p251, %p252
      %p254 = scmp.ne.s32.totalorder %s246, %s248
      %p255 = scmp.eq.s32.totalorder %s28, 1
      %p256 = por %p254, %p255
      %p257 = scmp.ne.s32.totalorder %s248, %s249
      %p258 = scmp.eq.s32.totalorder %s28, 0
      %p259 = por %p257, %p258
      %p260 = scmp.ne.s32.totalorder %s248, %s249
      %p261 = scmp.eq.s32.totalorder %s29, 1
      %p262 = por %p260, %p261
      %p264 = scmp.ne.s32.totalorder %s249, %s263
      %p265 = scmp.eq.s32.totalorder %s29, 0
      %p266 = por %p264, %p265
      %s268 = sadd.s32 %s267, 1
      %p271 = scmp.eq.s32.totalorder %s23, 1
      %p272 = scmp.ne.s32.totalorder %s267, %s269
      %p273 = scmp.eq.s32.totalorder %s23, 0
      %p274 = por %p272, %p273
      %p275 = scmp.ne.s32.totalorder %s267, %s269
      %p276 = scmp.eq.s32.totalorder %s28, 1
      %p277 = por %p275, %p276
      %p278 = scmp.ne.s32.totalorder %s269, %s270
      %p279 = scmp.eq.s32.totalorder %s28, 0
      %p280 = por %p278, %p279
      %p281 = scmp.ne.s32.totalorder %s269, %s270
      %p282 = scmp.eq.s32.totalorder %s29, 1
      %p283 = por %p281, %p282
      %p285 = scmp.ne.s32.totalorder %s270, %s284
      %p286 = scmp.eq.s32.totalorder %s29, 0
      %p287 = por %p285, %p286
      %s289 = sadd.s32 %s288, 1
      %p292 = scmp.eq.s32.totalorder %s23, 1
      %p293 = scmp.ne.s32.totalorder %s288, %s290
      %p294 = scmp.eq.s32.totalorder %s23, 0
      %p295 = por %p293, %p294
      %p296 = scmp.ne.s32.totalorder %s288, %s290
      %p297 = scmp.eq.s32.totalorder %s28, 1
      %p298 = por %p296, %p297
      %p299 = scmp.ne.s32.totalorder %s290, %s291
      %p300 = scmp.eq.s32.totalorder %s28, 0
      %p301 = por %p299, %p300
      %p302 = scmp.ne.s32.totalorder %s290, %s291
      %p303 = scmp.eq.s32.totalorder %s29, 1
      %p304 = por %p302, %p303
      %p306 = scmp.ne.s32.totalorder %s291, %s305
      %p307 = scmp.eq.s32.totalorder %s29, 0
      %p308 = por %p306, %p307
      %s310 = sadd.s32 %s309, 1
      %p313 = scmp.eq.s32.totalorder %s23, 1
      %p314 = scmp.ne.s32.totalorder %s309, %s311
      %p315 = scmp.eq.s32.totalorder %s23, 0
      %p316 = por %p314, %p315
      %p317 = scmp.ne.s32.totalorder %s309, %s311
      %p318 = scmp.eq.s32.totalorder %s28, 1
      %p319 = por %p317, %p318
      %p320 = scmp.ne.s32.totalorder %s311, %s312
      %p321 = scmp.eq.s32.totalorder %s28, 0
      %p322 = por %p320, %p321
      %p323 = scmp.ne.s32.totalorder %s311, %s312
      %p324 = scmp.eq.s32.totalorder %s29, 1
      %p325 = por %p323, %p324
      %p327 = scmp.ne.s32.totalorder %s312, %s326
      %p328 = scmp.eq.s32.totalorder %s29, 0
      %p329 = por %p327, %p328
      %s330 = ssub.s32 %s23, %s30
      %p331 = scmp.eq.s32.totalorder %s330, 0
      %s333 = sadd.s32 %s332, 1
      %s334 = scalar_select %p331, %s332, %s333
      %p337 = pneg %p331
      %p338 = scmp.eq.s32.totalorder %s23, 1
      %p339 = por %p337, %p338
      %p340 = scmp.ne.s32.totalorder %s332, %s335
      %p341 = scmp.eq.s32.totalorder %s23, 0
      %p342 = por %p340, %p341
      %p343 = scmp.ne.s32.totalorder %s332, %s335
      %p344 = scmp.eq.s32.totalorder %s28, 1
      %p345 = por %p343, %p344
      %p346 = scmp.ne.s32.totalorder %s335, %s336
      %p347 = scmp.eq.s32.totalorder %s28, 0
      %p348 = por %p346, %p347
      %p349 = scmp.ne.s32.totalorder %s335, %s336
      %p350 = scmp.eq.s32.totalorder %s29, 1
      %p351 = por %p349, %p350
      %p353 = scmp.ne.s32.totalorder %s336, %s352
      %p354 = scmp.eq.s32.totalorder %s29, 0
      %p355 = por %p353, %p354
      %p356 = scmp.le.s32.totalorder 1, %s23
      %p357 = scmp.lt.s32.totalorder %s23, 3
      %p358 = pnand %p356, %p357
      %p359 = pneg %p358
      // Predicated region
      $region9: #{tpu_custom_call.1} parent=5 // pred_check
        _
      $region10: #{tpu_custom_call.1} parent=5 // pred_check_branch
        %361 = sbr.rel (%p358) target = $region12
      $region11: #{tpu_custom_call.1} parent=5 // pred_region
        %s362 = ssub.s32 %s23, 1
        // Predicated region
        $region13: #{tpu_custom_call.1} parent=11 // pred_check
          %p363 = pneg %p70
        $region14: #{tpu_custom_call.1} parent=11 // pred_check_branch
          %365 = sbr.rel (%p363) target = $region16
        $region15: #{tpu_custom_call.1} parent=11 // pred_region
          _
        $region16: #{tpu_custom_call.1} parent=11 // pred_fallthru
          _
        // Predicated region
        $region17: #{tpu_custom_call.1} parent=11 // pred_check
          %p366 = pneg %p91
        $region18: #{tpu_custom_call.1} parent=11 // pred_check_branch
          %368 = sbr.rel (%p366) target = $region20
        $region19: #{tpu_custom_call.1} parent=11 // pred_region
          _
        $region20: #{tpu_custom_call.1} parent=11 // pred_fallthru
          _
        // Predicated region
        $region21: #{tpu_custom_call.1} parent=11 // pred_check
          %p369 = pneg %p112
        $region22: #{tpu_custom_call.1} parent=11 // pred_check_branch
          %371 = sbr.rel (%p369) target = $region24
        $region23: #{tpu_custom_call.1} parent=11 // pred_region
          _
        $region24: #{tpu_custom_call.1} parent=11 // pred_fallthru
          _
        // Predicated region
        $region25: #{tpu_custom_call.1} parent=11 // pred_check
          %p372 = pneg %p133
        $region26: #{tpu_custom_call.1} parent=11 // pred_check_branch
          %374 = sbr.rel (%p372) target = $region28
        $region27: #{tpu_custom_call.1} parent=11 // pred_region
          _
        $region28: #{tpu_custom_call.1} parent=11 // pred_fallthru
          _
        // Predicated region
        $region29: #{tpu_custom_call.1} parent=11 // pred_check
          %p375 = pneg %p154
        $region30: #{tpu_custom_call.1} parent=11 // pred_check_branch
          %377 = sbr.rel (%p375) target = $region32
        $region31: #{tpu_custom_call.1} parent=11 // pred_region
          _
        $region32: #{tpu_custom_call.1} parent=11 // pred_fallthru
          _
        // Predicated region
        $region33: #{tpu_custom_call.1} parent=11 // pred_check
          %p378 = pneg %p175
        $region34: #{tpu_custom_call.1} parent=11 // pred_check_branch
          %380 = sbr.rel (%p378) target = $region36
        $region35: #{tpu_custom_call.1} parent=11 // pred_region
          _
        $region36: #{tpu_custom_call.1} parent=11 // pred_fallthru
          _
        // Predicated region
        $region37: #{tpu_custom_call.1} parent=11 // pred_check
          %p381 = pneg %p196
        $region38: #{tpu_custom_call.1} parent=11 // pred_check_branch
          %383 = sbr.rel (%p381) target = $region40
        $region39: #{tpu_custom_call.1} parent=11 // pred_region
          _
        $region40: #{tpu_custom_call.1} parent=11 // pred_fallthru
          _
        // Predicated region
        $region41: #{tpu_custom_call.1} parent=11 // pred_check
          %p384 = pneg %p217
        $region42: #{tpu_custom_call.1} parent=11 // pred_check_branch
          %386 = sbr.rel (%p384) target = $region44
        $region43: #{tpu_custom_call.1} parent=11 // pred_region
          _
        $region44: #{tpu_custom_call.1} parent=11 // pred_fallthru
          _
        // Predicated region
        $region45: #{tpu_custom_call.1} parent=11 // pred_check
          %p387 = pneg %p238
        $region46: #{tpu_custom_call.1} parent=11 // pred_check_branch
          %389 = sbr.rel (%p387) target = $region48
        $region47: #{tpu_custom_call.1} parent=11 // pred_region
          _
        $region48: #{tpu_custom_call.1} parent=11 // pred_fallthru
          _
        // Predicated region
        $region49: #{tpu_custom_call.1} parent=11 // pred_check
          %p390 = pneg %p259
        $region50: #{tpu_custom_call.1} parent=11 // pred_check_branch
          %392 = sbr.rel (%p390) target = $region52
        $region51: #{tpu_custom_call.1} parent=11 // pred_region
          _
        $region52: #{tpu_custom_call.1} parent=11 // pred_fallthru
          _
        // Predicated region
        $region53: #{tpu_custom_call.1} parent=11 // pred_check
          %p393 = pneg %p280
        $region54: #{tpu_custom_call.1} parent=11 // pred_check_branch
          %395 = sbr.rel (%p393) target = $region56
        $region55: #{tpu_custom_call.1} parent=11 // pred_region
          _
        $region56: #{tpu_custom_call.1} parent=11 // pred_fallthru
          _
        // Predicated region
        $region57: #{tpu_custom_call.1} parent=11 // pred_check
          %p396 = pneg %p301
        $region58: #{tpu_custom_call.1} parent=11 // pred_check_branch
          %398 = sbr.rel (%p396) target = $region60
        $region59: #{tpu_custom_call.1} parent=11 // pred_region
          _
        $region60: #{tpu_custom_call.1} parent=11 // pred_fallthru
          _
        // Predicated region
        $region61: #{tpu_custom_call.1} parent=11 // pred_check
          %p399 = pneg %p322
        $region62: #{tpu_custom_call.1} parent=11 // pred_check_branch
          %401 = sbr.rel (%p399) target = $region64
        $region63: #{tpu_custom_call.1} parent=11 // pred_region
          _
        $region64: #{tpu_custom_call.1} parent=11 // pred_fallthru
          _
      $region12: #{tpu_custom_call.1} parent=5 // pred_fallthru
        _
      %p402 = scmp.lt.s32.totalorder %s23, 2
      // Predicated region
      $region65: #{tpu_custom_call.1} parent=5 // pred_check
        %p403 = pneg %p402
      $region66: #{tpu_custom_call.1} parent=5 // pred_check_branch
        %405 = sbr.rel (%p403) target = $region68
      $region67: #{tpu_custom_call.1} parent=5 // pred_region
        // Predicated region
        $region69: #{tpu_custom_call.1} parent=67 // pred_check
          %p406 = pneg %p43
        $region70: #{tpu_custom_call.1} parent=67 // pred_check_branch
          %408 = sbr.rel (%p406) target = $region72
        $region71: #{tpu_custom_call.1} parent=67 // pred_region
          %p409 = scmp.lt.s32.totalorder %s23, 1
          %s410 = scalar_select %p409, %s23, 1
          %s411 = smul.addr %s410, 4
          %s412 = scalar_lea.vmem %s0, %s411
        $region72: #{tpu_custom_call.1} parent=67 // pred_fallthru
          _
      $region68: #{tpu_custom_call.1} parent=5 // pred_fallthru
        _
      %p413 = scmp.le.s32.totalorder 1, %s23
      %p414 = scmp.lt.s32.totalorder %s23, 3
      %p415 = pnand %p413, %p414
      %p416 = pneg %p415
      // Predicated region
      $region73: #{tpu_custom_call.1} parent=5 // pred_check
        _
      $region74: #{tpu_custom_call.1} parent=5 // pred_check_branch
        %418 = sbr.rel (%p415) target = $region76
      $region75: #{tpu_custom_call.1} parent=5 // pred_region
        %s419 = ssub.s32 %s23, 1
        %p420 = scmp.lt.s32.totalorder %s28, 1
        %s421 = scalar_select %p420, %s28, 1
        %s422 = smul.addr %s421, 4
        %s423 = scalar_lea.vmem %s0, %s422
        %p424 = pneg %p49
        %p425 = pneg %p46
        %p426 = pneg %p70
        %p427 = pneg %p67
        %p428 = pneg %p91
        %p429 = pneg %p88
        %p430 = pneg %p112
        %p431 = pneg %p109
        %p432 = pneg %p133
        %p433 = pneg %p130
        %p434 = pneg %p154
        %p435 = pneg %p151
        %p436 = pneg %p175
        %p437 = pneg %p172
        %p438 = pneg %p196
        %p439 = pneg %p193
        %p440 = pneg %p217
        %p441 = pneg %p214
        %p442 = pneg %p238
        %p443 = pneg %p235
        %p444 = pneg %p259
        %p445 = pneg %p256
        %p446 = pneg %p280
        %p447 = pneg %p277
        %p448 = pneg %p301
        %p449 = pneg %p298
        %p450 = pneg %p322
        %p451 = pneg %p319
        %p452 = pneg %p348
        %p453 = pneg %p345
        %s454 = sand.u32 %s335, 1
        %s455 = scalar_lea.sflag [#allocation3], %s454
        %s456 = sand.u32 %s335, 1
        %s457 = scalar_lea.vmem [#allocation2], %s456
        %p458 = scmp.lt.s32.totalorder %s28, 1
        %s459 = scalar_select %p458, %s28, 1
        %s460 = smul.addr %s459, 4
        %s461 = scalar_lea.vmem %s0, %s460
        %v463 = vld [vmem:[%s1] sm:$0xf]
        %v464 = vld [vmem:[%s461] sm:$0xf]
        %v465 = vld [vmem:[%s2] sm:$0xf]
        %v466 = vld [vmem:[%s2 + $0x4] sm:$0xf]
        %v467 = vld [vmem:[%s2 + $0x8] sm:$0xf]
        %v468 = vld [vmem:[%s2 + $0xc] sm:$0xf]
        %v469 = vld [vmem:[%s3] sm:$0xf]
        %v470 = vld [vmem:[%s3 + $0x4] sm:$0xf]
        %v471 = vld [vmem:[%s3 + $0x8] sm:$0xf]
        %v472 = vld [vmem:[%s3 + $0xc] sm:$0xf]
        %v473 = vld [vmem:[%s4] sm:$0x1]
        %v478 = vunpack.c.l.b16 %v469
        %v479 = vunpack.c.l.b16 %v470
        %v480 = vunpack.c.l.b16 %v471
        %v481 = vunpack.c.l.b16 %v472
        %v482 = vpack.c.b16 %v479, %v478
        %v483 = vpack.c.b16 %v481, %v480
        %vm486 = vcmask 261120
        %v488 = vsel %vm486, %v464, 0
        %490 = vmatprep.subr.bf16.mxu0 0
        %491 = vmatpush1.bf16.msra.mxu0 %v482
        %492 = vmatprep.subr.bf16.mxu0 0
        %493 = vmatpush1.bf16.msra.mxu0 %v483
        %494 = vmatprep.subr.bf16.mxu0 0
        %495 = vmatpush1.bf16.msra.mxu0 0
        %496 = vmatprep.subr.bf16.mxu0 0
        %497 = vmatpush1.bf16.msra.mxu0 0
        %498 = vmatprep.subr.bf16.mxu0 0
        %499 = vmatpush1.bf16.msra.mxu0 0
        %500 = vmatprep.subr.bf16.mxu0 0
        %501 = vmatpush1.bf16.msra.mxu0 0
        %502 = vmatprep.subr.bf16.mxu0 0
        %503 = vmatpush1.bf16.msra.mxu0 0
        %504 = vmatprep.subr.bf16.mxu0 0
        %505 = vmatpush1.bf16.msra.mxu0 0
        %506 = vmatprep.subr.bf16.mxu0 0
        %507 = vmatpush1.bf16.msra.mxu0 0
        %508 = vmatprep.subr.bf16.mxu0 0
        %509 = vmatpush1.bf16.msra.mxu0 0
        %510 = vmatprep.subr.bf16.mxu0 0
        %511 = vmatpush1.bf16.msra.mxu0 0
        %512 = vmatprep.subr.bf16.mxu0 0
        %513 = vmatpush1.bf16.msra.mxu0 0
        %514 = vmatprep.subr.bf16.mxu0 0
        %515 = vmatpush1.bf16.msra.mxu0 0
        %516 = vmatprep.subr.bf16.mxu0 0
        %517 = vmatpush1.bf16.msra.mxu0 0
        %518 = vmatprep.subr.bf16.mxu0 0
        %519 = vmatpush1.bf16.msra.mxu0 0
        %520 = vmatprep.subr.bf16.mxu0 0
        %521 = vmatpush1.bf16.msra.mxu0 0
        %522 = vmatprep.mubr.bf16.mxu0 0
        %523 = vmatmul.mubr.bf16.gmra.mrb[0].mxu0 %v488
        %v524 = vpop.f32.mrb[0].mxu0
        %v525 = vadd.f32 0.0, %v524
        %v526 = vpop.f32.mrb[0].mxu0
        %v527 = vpop.f32.mrb[0].mxu0
        %v528 = vpop.f32.mrb[0].mxu0
        %529 = vdwg.mxu0
        %v530 = vpack.c.bf16 %v525, %v525
        %vm531 = vcmask 64512
        %v533 = vsel %vm531, %v463, 0
        %vm535 = vcmask 1043456
        %v537 = vsel %vm535, %v530, 0
        %539 = vmatprep.subr.bf16.mxu0 0
        %540 = vmatpush1.bf16.msra.mxu0 %v537
        %541 = vmatprep.subr.bf16.mxu0 0
        %542 = vmatpush1.bf16.msra.mxu0 0
        %543 = vmatprep.subr.bf16.mxu0 0
        %544 = vmatpush1.bf16.msra.mxu0 0
        %545 = vmatprep.subr.bf16.mxu0 0
        %546 = vmatpush1.bf16.msra.mxu0 0
        %547 = vmatprep.subr.bf16.mxu0 0
        %548 = vmatpush1.bf16.msra.mxu0 0
        %549 = vmatprep.subr.bf16.mxu0 0
        %550 = vmatpush1.bf16.msra.mxu0 0
        %551 = vmatprep.subr.bf16.mxu0 0
        %552 = vmatpush1.bf16.msra.mxu0 0
        %553 = vmatprep.subr.bf16.mxu0 0
        %554 = vmatpush1.bf16.msra.mxu0 0
        %555 = vmatprep.subr.bf16.mxu0 0
        %556 = vmatpush1.bf16.msra.mxu0 0
        %557 = vmatprep.subr.bf16.mxu0 0
        %558 = vmatpush1.bf16.msra.mxu0 0
        %559 = vmatprep.subr.bf16.mxu0 0
        %560 = vmatpush1.bf16.msra.mxu0 0
        %561 = vmatprep.subr.bf16.mxu0 0
        %562 = vmatpush1.bf16.msra.mxu0 0
        %563 = vmatprep.subr.bf16.mxu0 0
        %564 = vmatpush1.bf16.msra.mxu0 0
        %565 = vmatprep.subr.bf16.mxu0 0
        %566 = vmatpush1.bf16.msra.mxu0 0
        %567 = vmatprep.subr.bf16.mxu0 0
        %568 = vmatpush1.bf16.msra.mxu0 0
        %569 = vmatprep.subr.bf16.mxu0 0
        %570 = vmatpush1.bf16.msra.mxu0 0
        %571 = vmatprep.mubr.bf16.mxu0 0
        %572 = vmatmul.mubr.bf16.gmra.mrb[0].mxu0 %v533
        %v573 = vpop.f32.mrb[0].mxu0
        %v574 = vadd.f32 0.0, %v573
        %v575 = vpop.f32.mrb[0].mxu0
        %v576 = vpop.f32.mrb[0].mxu0
        %v577 = vpop.f32.mrb[0].mxu0
        %578 = vdwg.mxu0
        %v580 = vlaneseq
        %v581 = vshrl.u32 %v580, 7
        %v582 = vsub.s32 0, %v581
        %v583 = vrot.slane %v473, %v582
        %v589 = vunpack.c.l.b16 %v465
        %v590 = vunpack.c.l.b16 %v466
        %v591 = vunpack.c.l.b16 %v467
        %v592 = vunpack.c.l.b16 %v468
        %v593 = vpack.c.b16 %v590, %v589
        %v594 = vpack.c.b16 %v592, %v591
        %597 = vmatprep.subr.bf16.mxu0 0
        %598 = vmatpush1.bf16.msra.mxu0 %v593
        %599 = vmatprep.subr.bf16.mxu0 0
        %600 = vmatpush1.bf16.msra.mxu0 %v594
        %601 = vmatprep.subr.bf16.mxu0 0
        %602 = vmatpush1.bf16.msra.mxu0 0
        %603 = vmatprep.subr.bf16.mxu0 0
        %604 = vmatpush1.bf16.msra.mxu0 0
        %605 = vmatprep.subr.bf16.mxu0 0
        %606 = vmatpush1.bf16.msra.mxu0 0
        %607 = vmatprep.subr.bf16.mxu0 0
        %608 = vmatpush1.bf16.msra.mxu0 0
        %609 = vmatprep.subr.bf16.mxu0 0
        %610 = vmatpush1.bf16.msra.mxu0 0
        %611 = vmatprep.subr.bf16.mxu0 0
        %612 = vmatpush1.bf16.msra.mxu0 0
        %613 = vmatprep.subr.bf16.mxu0 0
        %614 = vmatpush1.bf16.msra.mxu0 0
        %615 = vmatprep.subr.bf16.mxu0 0
        %616 = vmatpush1.bf16.msra.mxu0 0
        %617 = vmatprep.subr.bf16.mxu0 0
        %618 = vmatpush1.bf16.msra.mxu0 0
        %619 = vmatprep.subr.bf16.mxu0 0
        %620 = vmatpush1.bf16.msra.mxu0 0
        %621 = vmatprep.subr.bf16.mxu0 0
        %622 = vmatpush1.bf16.msra.mxu0 0
        %623 = vmatprep.subr.bf16.mxu0 0
        %624 = vmatpush1.bf16.msra.mxu0 0
        %625 = vmatprep.subr.bf16.mxu0 0
        %626 = vmatpush1.bf16.msra.mxu0 0
        %627 = vmatprep.subr.bf16.mxu0 0
        %628 = vmatpush1.bf16.msra.mxu0 0
        %629 = vmatprep.mubr.bf16.mxu0 0
        %630 = vmatmul.mubr.bf16.gmra.mrb[0].mxu0 %v488
        %v631 = vpop.f32.mrb[0].mxu0
        %v632 = vadd.f32 %v583, %v631
        %v633 = vpop.f32.mrb[0].mxu0
        %v634 = vpop.f32.mrb[0].mxu0
        %v635 = vpop.f32.mrb[0].mxu0
        %636 = vdwg.mxu0
        %v637 = vadd.f32 %v632, %v574
        %v638 = vmax.f32 %v637, 0.0
        %v639 = vld [vmem:[%s5] sm:$0xf]
        %v640 = vld [vmem:[%s5 + $0x4] sm:$0xf]
        %v641 = vld [vmem:[%s5 + $0x8] sm:$0xf]
        %v642 = vld [vmem:[%s6] sm:$0xf]
        %v643 = vld [vmem:[%s6 + $0x4] sm:$0xf]
        %v644 = vld [vmem:[%s6 + $0x8] sm:$0xf]
        %v645 = vld [vmem:[%s7] sm:$0x1]
        %v646 = vpack.c.bf16 %v638, %v638
        %v650 = vunpack.c.l.b16 %v642
        %v651 = vunpack.c.l.b16 %v643
        %v652 = vunpack.c.l.b16 %v644
        %v653 = vpack.c.b16 %v651, %v650
        %v654 = vpack.c.b16 %v652, %v652
        %vm656 = vcmask 195584
        %v658 = vsel %vm656, %v646, 0
        %v661 = vsel %vm535, %v654, 0
        %663 = vmatprep.subr.bf16.mxu0 0
        %664 = vmatpush1.bf16.msra.mxu0 %v653
        %665 = vmatprep.subr.bf16.mxu0 0
        %666 = vmatpush1.bf16.msra.mxu0 %v661
        %667 = vmatprep.subr.bf16.mxu0 0
        %668 = vmatpush1.bf16.msra.mxu0 0
        %669 = vmatprep.subr.bf16.mxu0 0
        %670 = vmatpush1.bf16.msra.mxu0 0
        %671 = vmatprep.subr.bf16.mxu0 0
        %672 = vmatpush1.bf16.msra.mxu0 0
        %673 = vmatprep.subr.bf16.mxu0 0
        %674 = vmatpush1.bf16.msra.mxu0 0
        %675 = vmatprep.subr.bf16.mxu0 0
        %676 = vmatpush1.bf16.msra.mxu0 0
        %677 = vmatprep.subr.bf16.mxu0 0
        %678 = vmatpush1.bf16.msra.mxu0 0
        %679 = vmatprep.subr.bf16.mxu0 0
        %680 = vmatpush1.bf16.msra.mxu0 0
        %681 = vmatprep.subr.bf16.mxu0 0
        %682 = vmatpush1.bf16.msra.mxu0 0
        %683 = vmatprep.subr.bf16.mxu0 0
        %684 = vmatpush1.bf16.msra.mxu0 0
        %685 = vmatprep.subr.bf16.mxu0 0
        %686 = vmatpush1.bf16.msra.mxu0 0
        %687 = vmatprep.subr.bf16.mxu0 0
        %688 = vmatpush1.bf16.msra.mxu0 0
        %689 = vmatprep.subr.bf16.mxu0 0
        %690 = vmatpush1.bf16.msra.mxu0 0
        %691 = vmatprep.subr.bf16.mxu0 0
        %692 = vmatpush1.bf16.msra.mxu0 0
        %693 = vmatprep.subr.bf16.mxu0 0
        %694 = vmatpush1.bf16.msra.mxu0 0
        %695 = vmatprep.mubr.bf16.mxu0 0
        %696 = vmatmul.mubr.bf16.gmra.mrb[0].mxu0 %v658
        %v697 = vpop.f32.mrb[0].mxu0
        %v698 = vadd.f32 0.0, %v697
        %v699 = vpop.f32.mrb[0].mxu0
        %v700 = vpop.f32.mrb[0].mxu0
        %v701 = vpop.f32.mrb[0].mxu0
        %702 = vdwg.mxu0
        %v703 = vpack.c.bf16 %v698, %v698
        %v705 = vsel %vm535, %v703, 0
        %707 = vmatprep.subr.bf16.mxu0 0
        %708 = vmatpush1.bf16.msra.mxu0 %v705
        %709 = vmatprep.subr.bf16.mxu0 0
        %710 = vmatpush1.bf16.msra.mxu0 0
        %711 = vmatprep.subr.bf16.mxu0 0
        %712 = vmatpush1.bf16.msra.mxu0 0
        %713 = vmatprep.subr.bf16.mxu0 0
        %714 = vmatpush1.bf16.msra.mxu0 0
        %715 = vmatprep.subr.bf16.mxu0 0
        %716 = vmatpush1.bf16.msra.mxu0 0
        %717 = vmatprep.subr.bf16.mxu0 0
        %718 = vmatpush1.bf16.msra.mxu0 0
        %719 = vmatprep.subr.bf16.mxu0 0
        %720 = vmatpush1.bf16.msra.mxu0 0
        %721 = vmatprep.subr.bf16.mxu0 0
        %722 = vmatpush1.bf16.msra.mxu0 0
        %723 = vmatprep.subr.bf16.mxu0 0
        %724 = vmatpush1.bf16.msra.mxu0 0
        %725 = vmatprep.subr.bf16.mxu0 0
        %726 = vmatpush1.bf16.msra.mxu0 0
        %727 = vmatprep.subr.bf16.mxu0 0
        %728 = vmatpush1.bf16.msra.mxu0 0
        %729 = vmatprep.subr.bf16.mxu0 0
        %730 = vmatpush1.bf16.msra.mxu0 0
        %731 = vmatprep.subr.bf16.mxu0 0
        %732 = vmatpush1.bf16.msra.mxu0 0
        %733 = vmatprep.subr.bf16.mxu0 0
        %734 = vmatpush1.bf16.msra.mxu0 0
        %735 = vmatprep.subr.bf16.mxu0 0
        %736 = vmatpush1.bf16.msra.mxu0 0
        %737 = vmatprep.subr.bf16.mxu0 0
        %738 = vmatpush1.bf16.msra.mxu0 0
        %739 = vmatprep.mubr.bf16.mxu0 0
        %740 = vmatmul.mubr.bf16.gmra.mrb[0].mxu0 %v533
        %v741 = vpop.f32.mrb[0].mxu0
        %v742 = vadd.f32 0.0, %v741
        %v743 = vpop.f32.mrb[0].mxu0
        %v744 = vpop.f32.mrb[0].mxu0
        %v745 = vpop.f32.mrb[0].mxu0
        %746 = vdwg.mxu0
        %v748 = vlaneseq
        %v749 = vshrl.u32 %v748, 7
        %v750 = vsub.s32 0, %v749
        %v751 = vrot.slane %v645, %v750
        %v756 = vunpack.c.l.b16 %v639
        %v757 = vunpack.c.l.b16 %v640
        %v758 = vunpack.c.l.b16 %v641
        %v759 = vpack.c.b16 %v757, %v756
        %v760 = vpack.c.b16 %v758, %v758
        %v763 = vsel %vm535, %v760, 0
        %765 = vmatprep.subr.bf16.mxu0 0
        %766 = vmatpush1.bf16.msra.mxu0 %v759
        %767 = vmatprep.subr.bf16.mxu0 0
        %768 = vmatpush1.bf16.msra.mxu0 %v763
        %769 = vmatprep.subr.bf16.mxu0 0
        %770 = vmatpush1.bf16.msra.mxu0 0
        %771 = vmatprep.subr.bf16.mxu0 0
        %772 = vmatpush1.bf16.msra.mxu0 0
        %773 = vmatprep.subr.bf16.mxu0 0
        %774 = vmatpush1.bf16.msra.mxu0 0
        %775 = vmatprep.subr.bf16.mxu0 0
        %776 = vmatpush1.bf16.msra.mxu0 0
        %777 = vmatprep.subr.bf16.mxu0 0
        %778 = vmatpush1.bf16.msra.mxu0 0
        %779 = vmatprep.subr.bf16.mxu0 0
        %780 = vmatpush1.bf16.msra.mxu0 0
        %781 = vmatprep.subr.bf16.mxu0 0
        %782 = vmatpush1.bf16.msra.mxu0 0
        %783 = vmatprep.subr.bf16.mxu0 0
        %784 = vmatpush1.bf16.msra.mxu0 0
        %785 = vmatprep.subr.bf16.mxu0 0
        %786 = vmatpush1.bf16.msra.mxu0 0
        %787 = vmatprep.subr.bf16.mxu0 0
        %788 = vmatpush1.bf16.msra.mxu0 0
        %789 = vmatprep.subr.bf16.mxu0 0
        %790 = vmatpush1.bf16.msra.mxu0 0
        %791 = vmatprep.subr.bf16.mxu0 0
        %792 = vmatpush1.bf16.msra.mxu0 0
        %793 = vmatprep.subr.bf16.mxu0 0
        %794 = vmatpush1.bf16.msra.mxu0 0
        %795 = vmatprep.subr.bf16.mxu0 0
        %796 = vmatpush1.bf16.msra.mxu0 0
        %797 = vmatprep.mubr.bf16.mxu0 0
        %798 = vmatmul.mubr.bf16.gmra.mrb[0].mxu0 %v658
        %v799 = vpop.f32.mrb[0].mxu0
        %v800 = vadd.f32 %v751, %v799
        %v801 = vpop.f32.mrb[0].mxu0
        %v802 = vpop.f32.mrb[0].mxu0
        %v803 = vpop.f32.mrb[0].mxu0
        %804 = vdwg.mxu0
        %v805 = vadd.f32 %v800, %v742
        %v806 = vmax.f32 %v805, 0.0
        %v807 = vld [vmem:[%s8] sm:$0xf]
        %v808 = vld [vmem:[%s8 + $0x4] sm:$0xf]
        %v809 = vld [vmem:[%s9] sm:$0xf]
        %v810 = vld [vmem:[%s9 + $0x4] sm:$0xf]
        %v811 = vld [vmem:[%s10] sm:$0x1]
        %v812 = vpack.c.bf16 %v806, %v806
        %v815 = vunpack.c.l.b16 %v809
        %v816 = vunpack.c.l.b16 %v810
        %v817 = vpack.c.b16 %v816, %v815
        %vm819 = vcmask 130048
        %v821 = vsel %vm819, %v812, 0
        %823 = vmatprep.subr.bf16.mxu0 0
        %824 = vmatpush1.bf16.msra.mxu0 %v817
        %825 = vmatprep.subr.bf16.mxu0 0
        %826 = vmatpush1.bf16.msra.mxu0 0
        %827 = vmatprep.subr.bf16.mxu0 0
        %828 = vmatpush1.bf16.msra.mxu0 0
        %829 = vmatprep.subr.bf16.mxu0 0
        %830 = vmatpush1.bf16.msra.mxu0 0
        %831 = vmatprep.subr.bf16.mxu0 0
        %832 = vmatpush1.bf16.msra.mxu0 0
        %833 = vmatprep.subr.bf16.mxu0 0
        %834 = vmatpush1.bf16.msra.mxu0 0
        %835 = vmatprep.subr.bf16.mxu0 0
        %836 = vmatpush1.bf16.msra.mxu0 0
        %837 = vmatprep.subr.bf16.mxu0 0
        %838 = vmatpush1.bf16.msra.mxu0 0
        %839 = vmatprep.subr.bf16.mxu0 0
        %840 = vmatpush1.bf16.msra.mxu0 0
        %841 = vmatprep.subr.bf16.mxu0 0
        %842 = vmatpush1.bf16.msra.mxu0 0
        %843 = vmatprep.subr.bf16.mxu0 0
        %844 = vmatpush1.bf16.msra.mxu0 0
        %845 = vmatprep.subr.bf16.mxu0 0
        %846 = vmatpush1.bf16.msra.mxu0 0
        %847 = vmatprep.subr.bf16.mxu0 0
        %848 = vmatpush1.bf16.msra.mxu0 0
        %849 = vmatprep.subr.bf16.mxu0 0
        %850 = vmatpush1.bf16.msra.mxu0 0
        %851 = vmatprep.subr.bf16.mxu0 0
        %852 = vmatpush1.bf16.msra.mxu0 0
        %853 = vmatprep.subr.bf16.mxu0 0
        %854 = vmatpush1.bf16.msra.mxu0 0
        %855 = vmatprep.mubr.bf16.mxu0 0
        %856 = vmatmul.mubr.bf16.gmra.mrb[0].mxu0 %v821
        %v857 = vpop.f32.mrb[0].mxu0
        %v858 = vadd.f32 0.0, %v857
        %v859 = vpop.f32.mrb[0].mxu0
        %v860 = vpop.f32.mrb[0].mxu0
        %v861 = vpop.f32.mrb[0].mxu0
        %862 = vdwg.mxu0
        %v863 = vpack.c.bf16 %v858, %v858
        %v865 = vsel %vm535, %v863, 0
        %867 = vmatprep.subr.bf16.mxu0 0
        %868 = vmatpush1.bf16.msra.mxu0 %v865
        %869 = vmatprep.subr.bf16.mxu0 0
        %870 = vmatpush1.bf16.msra.mxu0 0
        %871 = vmatprep.subr.bf16.mxu0 0
        %872 = vmatpush1.bf16.msra.mxu0 0
        %873 = vmatprep.subr.bf16.mxu0 0
        %874 = vmatpush1.bf16.msra.mxu0 0
        %875 = vmatprep.subr.bf16.mxu0 0
        %876 = vmatpush1.bf16.msra.mxu0 0
        %877 = vmatprep.subr.bf16.mxu0 0
        %878 = vmatpush1.bf16.msra.mxu0 0
        %879 = vmatprep.subr.bf16.mxu0 0
        %880 = vmatpush1.bf16.msra.mxu0 0
        %881 = vmatprep.subr.bf16.mxu0 0
        %882 = vmatpush1.bf16.msra.mxu0 0
        %883 = vmatprep.subr.bf16.mxu0 0
        %884 = vmatpush1.bf16.msra.mxu0 0
        %885 = vmatprep.subr.bf16.mxu0 0
        %886 = vmatpush1.bf16.msra.mxu0 0
        %887 = vmatprep.subr.bf16.mxu0 0
        %888 = vmatpush1.bf16.msra.mxu0 0
        %889 = vmatprep.subr.bf16.mxu0 0
        %890 = vmatpush1.bf16.msra.mxu0 0
        %891 = vmatprep.subr.bf16.mxu0 0
        %892 = vmatpush1.bf16.msra.mxu0 0
        %893 = vmatprep.subr.bf16.mxu0 0
        %894 = vmatpush1.bf16.msra.mxu0 0
        %895 = vmatprep.subr.bf16.mxu0 0
        %896 = vmatpush1.bf16.msra.mxu0 0
        %897 = vmatprep.subr.bf16.mxu0 0
        %898 = vmatpush1.bf16.msra.mxu0 0
        %899 = vmatprep.mubr.bf16.mxu0 0
        %900 = vmatmul.mubr.bf16.gmra.mrb[0].mxu0 %v533
        %v901 = vpop.f32.mrb[0].mxu0
        %v902 = vadd.f32 0.0, %v901
        %v903 = vpop.f32.mrb[0].mxu0
        %v904 = vpop.f32.mrb[0].mxu0
        %v905 = vpop.f32.mrb[0].mxu0
        %906 = vdwg.mxu0
        %v908 = vlaneseq
        %v909 = vshrl.u32 %v908, 7
        %v910 = vsub.s32 0, %v909
        %v911 = vrot.slane %v811, %v910
        %v915 = vunpack.c.l.b16 %v807
        %v916 = vunpack.c.l.b16 %v808
        %v917 = vpack.c.b16 %v916, %v915
        %919 = vmatprep.subr.bf16.mxu0 0
        %920 = vmatpush1.bf16.msra.mxu0 %v917
        %921 = vmatprep.subr.bf16.mxu0 0
        %922 = vmatpush1.bf16.msra.mxu0 0
        %923 = vmatprep.subr.bf16.mxu0 0
        %924 = vmatpush1.bf16.msra.mxu0 0
        %925 = vmatprep.subr.bf16.mxu0 0
        %926 = vmatpush1.bf16.msra.mxu0 0
        %927 = vmatprep.subr.bf16.mxu0 0
        %928 = vmatpush1.bf16.msra.mxu0 0
        %929 = vmatprep.subr.bf16.mxu0 0
        %930 = vmatpush1.bf16.msra.mxu0 0
        %931 = vmatprep.subr.bf16.mxu0 0
        %932 = vmatpush1.bf16.msra.mxu0 0
        %933 = vmatprep.subr.bf16.mxu0 0
        %934 = vmatpush1.bf16.msra.mxu0 0
        %935 = vmatprep.subr.bf16.mxu0 0
        %936 = vmatpush1.bf16.msra.mxu0 0
        %937 = vmatprep.subr.bf16.mxu0 0
        %938 = vmatpush1.bf16.msra.mxu0 0
        %939 = vmatprep.subr.bf16.mxu0 0
        %940 = vmatpush1.bf16.msra.mxu0 0
        %941 = vmatprep.subr.bf16.mxu0 0
        %942 = vmatpush1.bf16.msra.mxu0 0
        %943 = vmatprep.subr.bf16.mxu0 0
        %944 = vmatpush1.bf16.msra.mxu0 0
        %945 = vmatprep.subr.bf16.mxu0 0
        %946 = vmatpush1.bf16.msra.mxu0 0
        %947 = vmatprep.subr.bf16.mxu0 0
        %948 = vmatpush1.bf16.msra.mxu0 0
        %949 = vmatprep.subr.bf16.mxu0 0
        %950 = vmatpush1.bf16.msra.mxu0 0
        %951 = vmatprep.mubr.bf16.mxu0 0
        %952 = vmatmul.mubr.bf16.gmra.mrb[0].mxu0 %v821
        %v953 = vpop.f32.mrb[0].mxu0
        %v954 = vadd.f32 %v911, %v953
        %v955 = vpop.f32.mrb[0].mxu0
        %v956 = vpop.f32.mrb[0].mxu0
        %v957 = vpop.f32.mrb[0].mxu0
        %958 = vdwg.mxu0
        %v959 = vadd.f32 %v954, %v902
        %v960 = vmax.f32 %v959, 0.0
        %v961 = vld [vmem:[%s11] sm:$0xf]
        %v962 = vld [vmem:[%s12] sm:$0xf]
        %v963 = vld [vmem:[%s13] sm:$0x1]
        %v964 = vpack.c.bf16 %v960, %v960
        %v966 = vsel %vm531, %v964, 0
        %v969 = vsel %vm535, %v962, 0
        %971 = vmatprep.subr.bf16.mxu0 0
        %972 = vmatpush1.bf16.msra.mxu0 %v969
        %973 = vmatprep.subr.bf16.mxu0 0
        %974 = vmatpush1.bf16.msra.mxu0 0
        %975 = vmatprep.subr.bf16.mxu0 0
        %976 = vmatpush1.bf16.msra.mxu0 0
        %977 = vmatprep.subr.bf16.mxu0 0
        %978 = vmatpush1.bf16.msra.mxu0 0
        %979 = vmatprep.subr.bf16.mxu0 0
        %980 = vmatpush1.bf16.msra.mxu0 0
        %981 = vmatprep.subr.bf16.mxu0 0
        %982 = vmatpush1.bf16.msra.mxu0 0
        %983 = vmatprep.subr.bf16.mxu0 0
        %984 = vmatpush1.bf16.msra.mxu0 0
        %985 = vmatprep.subr.bf16.mxu0 0
        %986 = vmatpush1.bf16.msra.mxu0 0
        %987 = vmatprep.subr.bf16.mxu0 0
        %988 = vmatpush1.bf16.msra.mxu0 0
        %989 = vmatprep.subr.bf16.mxu0 0
        %990 = vmatpush1.bf16.msra.mxu0 0
        %991 = vmatprep.subr.bf16.mxu0 0
        %992 = vmatpush1.bf16.msra.mxu0 0
        %993 = vmatprep.subr.bf16.mxu0 0
        %994 = vmatpush1.bf16.msra.mxu0 0
        %995 = vmatprep.subr.bf16.mxu0 0
        %996 = vmatpush1.bf16.msra.mxu0 0
        %997 = vmatprep.subr.bf16.mxu0 0
        %998 = vmatpush1.bf16.msra.mxu0 0
        %999 = vmatprep.subr.bf16.mxu0 0
        %1000 = vmatpush1.bf16.msra.mxu0 0
        %1001 = vmatprep.subr.bf16.mxu0 0
        %1002 = vmatpush1.bf16.msra.mxu0 0
        %1003 = vmatprep.mubr.bf16.mxu0 0
        %1004 = vmatmul.mubr.bf16.gmra.mrb[0].mxu0 %v966
        %v1005 = vpop.f32.mrb[0].mxu0
        %v1006 = vadd.f32 0.0, %v1005
        %v1007 = vpop.f32.mrb[0].mxu0
        %v1008 = vpop.f32.mrb[0].mxu0
        %v1009 = vpop.f32.mrb[0].mxu0
        %1010 = vdwg.mxu0
        %v1011 = vpack.c.bf16 %v1006, %v1006
        %v1013 = vsel %vm535, %v1011, 0
        %1015 = vmatprep.subr.bf16.mxu0 0
        %1016 = vmatpush1.bf16.msra.mxu0 %v1013
        %1017 = vmatprep.subr.bf16.mxu0 0
        %1018 = vmatpush1.bf16.msra.mxu0 0
        %1019 = vmatprep.subr.bf16.mxu0 0
        %1020 = vmatpush1.bf16.msra.mxu0 0
        %1021 = vmatprep.subr.bf16.mxu0 0
        %1022 = vmatpush1.bf16.msra.mxu0 0
        %1023 = vmatprep.subr.bf16.mxu0 0
        %1024 = vmatpush1.bf16.msra.mxu0 0
        %1025 = vmatprep.subr.bf16.mxu0 0
        %1026 = vmatpush1.bf16.msra.mxu0 0
        %1027 = vmatprep.subr.bf16.mxu0 0
        %1028 = vmatpush1.bf16.msra.mxu0 0
        %1029 = vmatprep.subr.bf16.mxu0 0
        %1030 = vmatpush1.bf16.msra.mxu0 0
        %1031 = vmatprep.subr.bf16.mxu0 0
        %1032 = vmatpush1.bf16.msra.mxu0 0
        %1033 = vmatprep.subr.bf16.mxu0 0
        %1034 = vmatpush1.bf16.msra.mxu0 0
        %1035 = vmatprep.subr.bf16.mxu0 0
        %1036 = vmatpush1.bf16.msra.mxu0 0
        %1037 = vmatprep.subr.bf16.mxu0 0
        %1038 = vmatpush1.bf16.msra.mxu0 0
        %1039 = vmatprep.subr.bf16.mxu0 0
        %1040 = vmatpush1.bf16.msra.mxu0 0
        %1041 = vmatprep.subr.bf16.mxu0 0
        %1042 = vmatpush1.bf16.msra.mxu0 0
        %1043 = vmatprep.subr.bf16.mxu0 0
        %1044 = vmatpush1.bf16.msra.mxu0 0
        %1045 = vmatprep.subr.bf16.mxu0 0
        %1046 = vmatpush1.bf16.msra.mxu0 0
        %1047 = vmatprep.mubr.bf16.mxu0 0
        %1048 = vmatmul.mubr.bf16.gmra.mrb[0].mxu0 %v533
        %v1049 = vpop.f32.mrb[0].mxu0
        %v1050 = vadd.f32 0.0, %v1049
        %v1051 = vpop.f32.mrb[0].mxu0
        %v1052 = vpop.f32.mrb[0].mxu0
        %v1053 = vpop.f32.mrb[0].mxu0
        %1054 = vdwg.mxu0
        %v1056 = vlaneseq
        %v1057 = vshrl.u32 %v1056, 7
        %v1058 = vsub.s32 0, %v1057
        %v1059 = vrot.slane %v963, %v1058
        %v1062 = vsel %vm535, %v961, 0
        %1064 = vmatprep.subr.bf16.mxu0 0
        %1065 = vmatpush1.bf16.msra.mxu0 %v1062
        %1066 = vmatprep.subr.bf16.mxu0 0
        %1067 = vmatpush1.bf16.msra.mxu0 0
        %1068 = vmatprep.subr.bf16.mxu0 0
        %1069 = vmatpush1.bf16.msra.mxu0 0
        %1070 = vmatprep.subr.bf16.mxu0 0
        %1071 = vmatpush1.bf16.msra.mxu0 0
        %1072 = vmatprep.subr.bf16.mxu0 0
        %1073 = vmatpush1.bf16.msra.mxu0 0
        %1074 = vmatprep.subr.bf16.mxu0 0
        %1075 = vmatpush1.bf16.msra.mxu0 0
        %1076 = vmatprep.subr.bf16.mxu0 0
        %1077 = vmatpush1.bf16.msra.mxu0 0
        %1078 = vmatprep.subr.bf16.mxu0 0
        %1079 = vmatpush1.bf16.msra.mxu0 0
        %1080 = vmatprep.subr.bf16.mxu0 0
        %1081 = vmatpush1.bf16.msra.mxu0 0
        %1082 = vmatprep.subr.bf16.mxu0 0
        %1083 = vmatpush1.bf16.msra.mxu0 0
        %1084 = vmatprep.subr.bf16.mxu0 0
        %1085 = vmatpush1.bf16.msra.mxu0 0
        %1086 = vmatprep.subr.bf16.mxu0 0
        %1087 = vmatpush1.bf16.msra.mxu0 0
        %1088 = vmatprep.subr.bf16.mxu0 0
        %1089 = vmatpush1.bf16.msra.mxu0 0
        %1090 = vmatprep.subr.bf16.mxu0 0
        %1091 = vmatpush1.bf16.msra.mxu0 0
        %1092 = vmatprep.subr.bf16.mxu0 0
        %1093 = vmatpush1.bf16.msra.mxu0 0
        %1094 = vmatprep.subr.bf16.mxu0 0
        %1095 = vmatpush1.bf16.msra.mxu0 0
        %1096 = vmatprep.mubr.bf16.mxu0 0
        %1097 = vmatmul.mubr.bf16.gmra.mrb[0].mxu0 %v966
        %v1098 = vpop.f32.mrb[0].mxu0
        %v1099 = vadd.f32 %v1059, %v1098
        %v1100 = vpop.f32.mrb[0].mxu0
        %v1101 = vpop.f32.mrb[0].mxu0
        %v1102 = vpop.f32.mrb[0].mxu0
        %1103 = vdwg.mxu0
        %v1104 = vadd.f32 %v1099, %v1050
        %v1105 = vcombine.high %v1104, 0.0
        %v1107 = vunpack.c.l.s4 1983009808
        %v1108 = vunpack.c.0.s8 %v1107
        %v1109 = vlaneseq
        %v1110 = vshrl.u32 %v1109, 7
        %v1111 = vsub.s32 %v1108, %v1110
        %v1112 = vrot.slane %v1104, %v1111
        %v1114 = vunpack.c.l.s4 1983009808
        %v1115 = vunpack.c.0.s8 %v1114
        %v1116 = vlaneseq
        %v1117 = vshrl.u32 %v1116, 7
        %v1118 = vsub.s32 %v1115, %v1117
        %v1119 = vrot.slane %v1105, %v1118
        %v1120 = vcombine.high %v1112, 0.0
        %v1122 = vunpack.c.l.s4 1934713408
        %v1123 = vunpack.c.0.s8 %v1122
        %v1124 = vlaneseq
        %v1125 = vshrl.u32 %v1124, 7
        %v1126 = vsub.s32 %v1123, %v1125
        %v1127 = vrot.slane %v1112, %v1126
        %v1129 = vunpack.c.l.s4 1934713408
        %v1130 = vunpack.c.0.s8 %v1129
        %v1131 = vlaneseq
        %v1132 = vshrl.u32 %v1131, 7
        %v1133 = vsub.s32 %v1130, %v1132
        %v1134 = vrot.slane %v1120, %v1133
        %v1135 = vcombine.high %v1119, 0.0
        %v1137 = vunpack.c.l.s4 1934713408
        %v1138 = vunpack.c.0.s8 %v1137
        %v1139 = vlaneseq
        %v1140 = vshrl.u32 %v1139, 7
        %v1141 = vsub.s32 %v1138, %v1140
        %v1142 = vrot.slane %v1119, %v1141
        %v1144 = vunpack.c.l.s4 1934713408
        %v1145 = vunpack.c.0.s8 %v1144
        %v1146 = vlaneseq
        %v1147 = vshrl.u32 %v1146, 7
        %v1148 = vsub.s32 %v1145, %v1147
        %v1149 = vrot.slane %v1135, %v1148
        %v1150 = vcombine.high %v1127, 0.0
        %v1151 = vcombine.high %v1134, 0.0
        %v1152 = vcombine.high %v1142, 0.0
        %v1153 = vcombine.high %v1149, 0.0
        %1155 = vrot.lane.b32.xlu0 %v1150, 4
        %v1156 = vpop.permute.xlu0 %1155
        %1159 = vrot.lane.b32.xlu0 %v1134, 8
        %v1160 = vpop.permute.xlu0 %1159
        %1163 = vrot.lane.b32.xlu0 %v1151, 12
        %v1164 = vpop.permute.xlu0 %1163
        %1167 = vrot.lane.b32.xlu0 %v1142, 16
        %v1168 = vpop.permute.xlu0 %1167
        %1171 = vrot.lane.b32.xlu0 %v1152, 20
        %v1172 = vpop.permute.xlu0 %1171
        %1175 = vrot.lane.b32.xlu0 %v1149, 24
        %v1176 = vpop.permute.xlu0 %1175
        %1179 = vrot.lane.b32.xlu0 %v1153, 28
        %v1180 = vpop.permute.xlu0 %1179
        %vm1182 = vcmask 31744
        %v1183 = vsel %vm1182, %v1127, %v1156
        %v1184 = vsel %vm531, %v1183, %v1160
        %vm1185 = vcmask 97280
        %v1186 = vsel %vm1185, %v1184, %v1164
        %v1187 = vsel %vm819, %v1186, %v1168
        %vm1188 = vcmask 162816
        %v1189 = vsel %vm1188, %v1187, %v1172
        %v1190 = vsel %vm656, %v1189, %v1176
        %vm1191 = vcmask 228352
        %v1192 = vsel %vm1191, %v1190, %v1180
        %vm1193 = vcmask 253952
        %1194 = vst.msk [vmem:[%s457] sm:$0x1] %vm1193, %v1192
        %s1195 = sand.u32 %s335, 1
        %s1196 = scalar_lea.sflag [#allocation3], %s1195
        %s1197 = sand.u32 %s335, 1
        %s1198 = scalar_lea.vmem [#allocation2], %s1197
        // Predicated region
        $region77: #{tpu_custom_call.1} parent=75 // pred_check
          %p1199 = pneg %p345
        $region78: #{tpu_custom_call.1} parent=75 // pred_check_branch
          %1201 = sbr.rel (%p1199) target = $region80
        $region79: #{tpu_custom_call.1} parent=75 // pred_region
          %s1203 = ssub.s32 16, 16
          %1204 = vsyncadd %s1196, %s1203
          %s1205 = smul.addr %s28, 16
          %s1206 = scalar_lea.hbm %s14, %s1205
          %s1208 = sshll.u32 %s1198, 4
          %s1209 = int_to_ptr.vmem [resolvable:$true] %s1208
          %1211 = dma.vmem_to_hbm [thread:$0]  %s1209, 16, %s1206, %s1196
        $region80: #{tpu_custom_call.1} parent=75 // pred_fallthru
          _
      $region76: #{tpu_custom_call.1} parent=5 // pred_fallthru
        _
      %p1212 = scmp.le.s32.totalorder 2, %s23
      // Predicated region
      $region81: #{tpu_custom_call.1} parent=5 // pred_check
        %p1213 = pneg %p1212
      $region82: #{tpu_custom_call.1} parent=5 // pred_check_branch
        %1215 = sbr.rel (%p1213) target = $region84
      $region83: #{tpu_custom_call.1} parent=5 // pred_region
        %s1216 = ssub.s32 %s23, 2
        // Predicated region
        $region85: #{tpu_custom_call.1} parent=83 // pred_check
          %p1217 = pneg %p351
        $region86: #{tpu_custom_call.1} parent=83 // pred_check_branch
          %1219 = sbr.rel (%p1217) target = $region88
        $region87: #{tpu_custom_call.1} parent=83 // pred_region
          %s1220 = sand.u32 %s336, 1
          %s1221 = scalar_lea.sflag [#allocation3], %s1220
          %s1222 = sand.u32 %s336, 1
          %s1223 = scalar_lea.vmem [#allocation2], %s1222
          %1224 = dma.done %s1221, 16
        $region88: #{tpu_custom_call.1} parent=83 // pred_fallthru
          _
      $region84: #{tpu_custom_call.1} parent=5 // pred_fallthru
        _
    $region6: #{tpu_custom_call.1} parent=1 // loop_footer
      %s27 = sadd.s32 1, %s23
    $region7: #{tpu_custom_call.1} parent=1 // loop_footer_branch
      %22 = sbr.rel target = $region3
    $region8: #{tpu_custom_call.1} parent=1 // loop_exit
      _
    %1225 = vsyncpa [#allocation3], 1
    %s1226 = scalar_lea.sflag [#allocation3], 1
    %1227 = vsyncpa %s1226, 1

</llo_original>
